<compile_context>
chip_gen: v5e
topology: v5e:2x2
jax: 0.10.0
libtpu: 0.0.40
codegen_flags: <defaults>
</compile_context>

<pallas_src>
import functools
import math

import jax
import jax.numpy as jnp
from jax import lax
from jax.experimental import pallas as pl
from jax.experimental.pallas import tpu as pltpu


# ---------------- small synthetic configuration ----------------
BATCH = 2
CHANNELS = 16            # feature-map channels (1280 in the real model)
FEAT_HW = 8              # feature-map spatial size (7 for image_size=224)
PATCH = 4                # patch_size
NUM_PATCHES = (FEAT_HW // PATCH) ** 2          # 4
PATCH_DIM = CHANNELS * PATCH * PATCH           # 256
DIM = 32                 # transformer dim (1024 in the real model)
DEPTH = 2                # transformer depth (6 in the real model)
HEADS = 2                # (8 in the real model)
DIM_HEAD = 8             # (64 in the real model)
INNER = HEADS * DIM_HEAD
MLP_DIM = 64             # (2048 in the real model)
NUM_CLASSES = 1
WEIGHT = 0.5             # mixing coefficient (version = cross_attention-spatial-cat)
SEQ = NUM_PATCHES + 1    # +1 cls token (5)
SEQ_PAD = ((SEQ + 7) // 8) * 8                 # sublane-aligned padded sequence (8)
OUT_PAD = 128            # lane-dense padded head output width


# ---------------- in-kernel helpers ----------------
def _softmax_last(x):
    m = jnp.max(x, axis=-1, keepdims=True)
    e = jnp.exp(x - m)
    return e * pl.reciprocal(jnp.sum(e, axis=-1, keepdims=True), approx=True)


def _layernorm(x, gamma, beta, eps=1e-5):
    mean = jnp.mean(x, axis=-1, keepdims=True)
    var = jnp.mean((x - mean) ** 2, axis=-1, keepdims=True)
    return (x - mean) * lax.rsqrt(var + eps) * gamma + beta


def _gelu_tanh(x):
    # TODO(synk): PyTorch nn.GELU defaults to the exact erf form; tanh approximation
    # is used here (~1e-3 level deviation).
    return 0.5 * x * (1.0 + jnp.tanh(0.7978845608028654 * (x + 0.044715 * x * x * x)))


# ---------------- the fused kernel ----------------
def fused_vit_kernel(sv_ref, fv_ref, ws_ref, wa_ref, be_ref, cls_ref, pos_ref,
                     g1_ref, b1_ref, wqkv_ref, wo_ref, bo_ref,
                     g2_ref, b2_ref, wf1_ref, bf1_ref, wf2_ref, bf2_ref,
                     wh1_ref, bh1_ref, wh2_ref, bh2_ref,
                     out_ref, x_scr, *,
                     batch, seq, seq_pad, n_patches, heads, dim_head, patch_dim):
    d = pl.program_id(0)
    inner = heads * dim_head
    bsp = batch * seq_pad
    # key-index iota reused by both attention masks (built in-kernel, no HBM masks)
    k_ids = lax.broadcasted_iota(jnp.int32, (1, 1, seq_pad), 2)

    # ---- first depth step: cross-attention + patch_to_embedding_cat + cls/pos ----
    @pl.when(d == 0)
    def _init():
        sv = sv_ref[...]                        # (B, SEQ_PAD, Pd), patches at rows 1..N
        fv = fv_ref[...]
        # scale_dot: (q / sqrt(E)) @ k^T per batch, softmax over the real patch keys only.
        logits = jnp.einsum('bqd,bkd->bqk', sv, fv,
                            preferred_element_type=jnp.float32)
        logits = logits * (1.0 / math.sqrt(patch_dim))
        valid_k = jnp.logical_and(k_ids >= 1, k_ids <= n_patches)
        attn = _softmax_last(jnp.where(valid_k, logits, -1e30))
        out_attn = jnp.einsum('bqk,bkd->bqd', attn, fv,
                              preferred_element_type=jnp.float32)
        # cat([sv, weight*out_attn]) @ W_cat + b == sv@Ws + out_attn@(weight*Wa) + b
        # ('weight' folded into wa at init).  Row-fused 2D matmuls (aligned reshapes).
        sv2 = sv.reshape(bsp, patch_dim)
        oa2 = out_attn.reshape(bsp, patch_dim)
        embed = (jnp.dot(sv2, ws_ref[...], preferred_element_type=jnp.float32)
                 + jnp.dot(oa2, wa_ref[...], preferred_element_type=jnp.float32)
                 + be_ref[...])                 # (B*SEQ_PAD, DIM)
        embed3 = embed.reshape(batch, seq_pad, embed.shape[-1])
        # row 0 <- cls + pos[0]; rows 1..N <- patch embeds + pos[1..N]; pad rows harmless
        # (finite, key-masked in every attention below).  One select + one full store.
        row_ids = lax.broadcasted_iota(jnp.int32, (1, seq_pad, 1), 1)
        cls_row = (cls_ref[...] + pos_ref[0:1, :])[None, :, :]        # (1, 1, DIM)
        x3 = jnp.where(row_ids == 0, cls_row, embed3 + pos_ref[...][None, :, :])
        x_scr[...] = x3.reshape(bsp, x3.shape[-1])
        # nn.Dropout(emb_dropout): identity at inference.

    # ---- transformer layer d (PreNorm MHA + PreNorm FFN, residuals) ----
    x = x_scr[...]                              # (B*SEQ_PAD, DIM), depth-resident
    h = _layernorm(x, g1_ref[...], b1_ref[...])
    qkv = jnp.dot(h, wqkv_ref[...], preferred_element_type=jnp.float32)   # (BSP, 3*INNER)
    qkv3 = qkv.reshape(batch, seq_pad, 3 * inner)        # aligned view (layout no-op)
    key_valid = k_ids < seq                               # mask padded key rows only
    scale = dim_head ** -0.5
    wo = wo_ref[...]
    attn_out = jnp.zeros_like(x)
    for hd in range(heads):                     # static unroll; per-batch batched attention
        q = qkv3[:, :, hd * dim_head:(hd + 1) * dim_head] * scale
        k = qkv3[:, :, inner + hd * dim_head:inner + (hd + 1) * dim_head]
        v = qkv3[:, :, 2 * inner + hd * dim_head:2 * inner + (hd + 1) * dim_head]
        dots = jnp.einsum('bqd,bkd->bqk', q, k, preferred_element_type=jnp.float32)
        p = _softmax_last(jnp.where(key_valid, dots, -1e30))
        o_h = jnp.einsum('bqk,bkd->bqd', p, v, preferred_element_type=jnp.float32)
        # accumulate the output projection per head (no lane-slab VMEM scratch).
        # TODO(synk): at production dim_head=64 concat heads in-register and do one
        # (BSP, INNER)@(INNER, DIM) projection for better MXU K utilization.
        attn_out = attn_out + jnp.dot(o_h.reshape(bsp, dim_head),
                                      wo[hd * dim_head:(hd + 1) * dim_head, :],
                                      preferred_element_type=jnp.float32)
    x = x + attn_out + bo_ref[...]

    h2 = _layernorm(x, g2_ref[...], b2_ref[...])
    ff = jnp.dot(h2, wf1_ref[...], preferred_element_type=jnp.float32) + bf1_ref[...]
    ff = _gelu_tanh(ff)
    x = x + jnp.dot(ff, wf2_ref[...], preferred_element_type=jnp.float32) + bf2_ref[...]
    x_scr[...] = x

    # ---- last depth step: to_cls_token -> mlp_head (cls rows only) -> sigmoid ----
    @pl.when(d == pl.num_programs(0) - 1)
    def _final():
        # Gather the B cls rows (rows b*SEQ_PAD) via a one-hot matmul (MXU "gather"):
        # avoids strided/single-row masked loads and runs the head on B rows only.
        cols = lax.broadcasted_iota(jnp.int32, (batch, bsp), 1)
        rows = lax.broadcasted_iota(jnp.int32, (batch, bsp), 0)
        sel = (cols == rows * seq_pad).astype(jnp.float32)             # (B, BSP)
        cls_mat = jnp.dot(sel, x, preferred_element_type=jnp.float32)  # (B, DIM)
        hh = jnp.maximum(
            jnp.dot(cls_mat, wh1_ref[...], preferred_element_type=jnp.float32)
            + bh1_ref[...], 0.0)                                       # ReLU
        logits = (jnp.dot(hh, wh2_ref[...], preferred_element_type=jnp.float32)
                  + bh2_ref[...])                                      # (B, 128) lane-dense
        out_ref[...] = 1.0 / (1.0 + jnp.exp(-logits))                  # exact sigmoid


def dual_vit_fused_call(sv_p, fv_p, p):
    kern = functools.partial(fused_vit_kernel, batch=BATCH, seq=SEQ, seq_pad=SEQ_PAD,
                             n_patches=NUM_PATCHES, heads=HEADS,
                             dim_head=DIM_HEAD, patch_dim=PATCH_DIM)

    def cspec(shape):                       # grid-invariant: fetched once, stays resident
        # TODO(synk): at production sizes use pipeline_mode=pl.Buffered(1) here and
        # move first/last-step-only inputs to pl.ANY + manual DMA (v7x VMEM budget).
        n = len(shape)
        return pl.BlockSpec(shape, lambda d, n=n: (0,) * n)

    def dspec(shape):                       # depth-stacked weights, leading dim squeezed
        n = len(shape)
        return pl.BlockSpec((None,) + tuple(shape[1:]),
                            lambda d, n=n: (d,) + (0,) * (n - 1))

    return pl.pallas_call(
        kern,
        out_shape=jax.ShapeDtypeStruct((BATCH, OUT_PAD), jnp.float32),
        grid=(DEPTH,),
        in_specs=[
            cspec((BATCH, SEQ_PAD, PATCH_DIM)), cspec((BATCH, SEQ_PAD, PATCH_DIM)),
            cspec((PATCH_DIM, DIM)), cspec((PATCH_DIM, DIM)), cspec((1, DIM)),
            cspec((1, DIM)), cspec((SEQ_PAD, DIM)),
            dspec((DEPTH, 1, DIM)), dspec((DEPTH, 1, DIM)),
            dspec((DEPTH, DIM, 3 * INNER)),
            dspec((DEPTH, INNER, DIM)), dspec((DEPTH, 1, DIM)),
            dspec((DEPTH, 1, DIM)), dspec((DEPTH, 1, DIM)),
            dspec((DEPTH, DIM, MLP_DIM)), dspec((DEPTH, 1, MLP_DIM)),
            dspec((DEPTH, MLP_DIM, DIM)), dspec((DEPTH, 1, DIM)),
            cspec((DIM, MLP_DIM)), cspec((1, MLP_DIM)),
            cspec((MLP_DIM, OUT_PAD)), cspec((1, OUT_PAD)),
        ],
        out_specs=pl.BlockSpec((BATCH, OUT_PAD), lambda d: (0, 0)),
        scratch_shapes=[pltpu.VMEM((BATCH * SEQ_PAD, DIM), jnp.float32)],  # resident act.
        # Depth carries state in VMEM -> sequential ("arbitrary").
        # TODO(synk): add a leading "parallel" batch-chunk axis for v7x's 2nd core.
        compiler_params=pltpu.CompilerParams(
            dimension_semantics=("arbitrary",),
            vmem_limit_bytes=48 * 1024 * 1024),
    )(sv_p, fv_p, p['ws'], p['wa'], p['be'], p['cls'], p['pos'],
      p['g1'], p['b1'], p['wqkv'], p['wo'], p['bo'], p['g2'], p['b2'],
      p['wf1'], p['bf1'], p['wf2'], p['bf2'],
      p['wh1'], p['bh1'], p['wh2'], p['bh2'])


# ---------------- glue: rearrange + parameter setup ----------------
def to_patches(feat, pch):
    # einops: 'b c (h p1) (w p2) -> b (h w) (p1 p2 c)'
    B, C, H, W = feat.shape
    h, w = H // pch, W // pch
    x = feat.reshape(B, C, h, pch, w, pch)
    x = x.transpose(0, 2, 4, 3, 5, 1)        # b h w p1 p2 c
    return x.reshape(B, h * w, pch * pch * C)


def init_params(key):
    ks = jax.random.split(key, 5 + DEPTH)

    def nrm(k, shape, std=0.02):
        return (std * jax.random.normal(k, shape)).astype(jnp.float32)

    p = {}
    pos = jax.random.normal(ks[0], (SEQ, DIM), jnp.float32)
    p['pos'] = jnp.pad(pos, ((0, SEQ_PAD - SEQ), (0, 0)))    # zero rows for pad slots
    p['cls'] = jax.random.normal(ks[1], (1, DIM), jnp.float32)
    # patch_to_embedding_cat: Linear(2*PATCH_DIM, DIM); split into the two column halves
    # and fold the scalar mixing `weight` into the attention half.
    w_cat = nrm(ks[2], (2 * PATCH_DIM, DIM))
    p['ws'] = w_cat[:PATCH_DIM]
    p['wa'] = WEIGHT * w_cat[PATCH_DIM:]
    p['be'] = jnp.zeros((1, DIM), jnp.float32)

    wqkv_l, wo_l, wf1_l, wf2_l = [], [], [], []
    for dd in range(DEPTH):
        kd = jax.random.split(ks[3 + dd], 4)
        wqkv_l.append(nrm(kd[0], (DIM, 3 * INNER)))           # to_qkv (no bias)
        wo_l.append(nrm(kd[1], (INNER, DIM)))                 # to_out Linear
        wf1_l.append(nrm(kd[2], (DIM, MLP_DIM)))
        wf2_l.append(nrm(kd[3], (MLP_DIM, DIM)))
    p['wqkv'] = jnp.stack(wqkv_l)
    p['wo'] = jnp.stack(wo_l)
    p['wf1'] = jnp.stack(wf1_l)
    p['wf2'] = jnp.stack(wf2_l)
    p['g1'] = jnp.ones((DEPTH, 1, DIM), jnp.float32)
    p['b1'] = jnp.zeros((DEPTH, 1, DIM), jnp.float32)
    p['g2'] = jnp.ones((DEPTH, 1, DIM), jnp.float32)
    p['b2'] = jnp.zeros((DEPTH, 1, DIM), jnp.float32)
    p['bo'] = jnp.zeros((DEPTH, 1, DIM), jnp.float32)
    p['bf1'] = jnp.zeros((DEPTH, 1, MLP_DIM), jnp.float32)
    p['bf2'] = jnp.zeros((DEPTH, 1, DIM), jnp.float32)

    p['wh1'] = nrm(ks[3 + DEPTH], (DIM, MLP_DIM))
    p['bh1'] = jnp.zeros((1, MLP_DIM), jnp.float32)
    wh2 = nrm(ks[4 + DEPTH], (MLP_DIM, NUM_CLASSES))
    p['wh2'] = jnp.pad(wh2, ((0, 0), (0, OUT_PAD - NUM_CLASSES)))   # lane-dense padded head
    p['bh2'] = jnp.zeros((1, OUT_PAD), jnp.float32)
    return p


@jax.jit
def dual_efficient_vit_v2_forward(spatial_feats, freq_feats, params):
    # TODO(synk): EfficientNet-b0 `extract_features` backbones (spatial/freq extractors)
    # are not ported; this forward consumes the extracted (B, C, H, W) feature maps.
    sv = to_patches(spatial_feats, PATCH)                    # (B, N, Pd)
    fv = to_patches(freq_feats, PATCH)
    # place patches at rows 1..N of a SEQ_PAD-row slab (row 0 = cls slot, tail = pad)
    pad = ((0, 0), (1, SEQ_PAD - 1 - NUM_PATCHES), (0, 0))
    sv_p = jnp.pad(sv, pad)
    fv_p = jnp.pad(fv, pad)
    out_pad = dual_vit_fused_call(sv_p, fv_p, params)        # (B, 128)
    return out_pad[:, :NUM_CLASSES]                          # sigmoid outputs


if __name__ == "__main__":
    key = jax.random.PRNGKey(0)
    k1, k2, k3 = jax.random.split(key, 3)
    spatial_features = jax.random.normal(k1, (BATCH, CHANNELS, FEAT_HW, FEAT_HW), jnp.float32)
    frequency_features = jax.random.normal(k2, (BATCH, CHANNELS, FEAT_HW, FEAT_HW), jnp.float32)
    params = init_params(k3)

    out = dual_efficient_vit_v2_forward(spatial_features, frequency_features, params)
    out = jax.block_until_ready(out)
    assert out.shape == (BATCH, NUM_CLASSES)
    assert bool(jnp.all(jnp.isfinite(out)))
    print("KERNEL_OK")
</pallas_src>

<mosaic_0001>
module attributes {stable_mosaic.version = 11 : i64} {
  func.func @fused_vit_kernel(%arg0: i32, %arg1: memref<2x8x256xf32, #tpu.memory_space<vmem>>, %arg2: memref<2x8x256xf32, #tpu.memory_space<vmem>>, %arg3: memref<256x32xf32, #tpu.memory_space<vmem>>, %arg4: memref<256x32xf32, #tpu.memory_space<vmem>>, %arg5: memref<1x32xf32, #tpu.memory_space<vmem>>, %arg6: memref<1x32xf32, #tpu.memory_space<vmem>>, %arg7: memref<8x32xf32, #tpu.memory_space<vmem>>, %arg8: memref<1x1x32xf32, #tpu.memory_space<vmem>>, %arg9: memref<1x1x32xf32, #tpu.memory_space<vmem>>, %arg10: memref<1x32x48xf32, #tpu.memory_space<vmem>>, %arg11: memref<1x16x32xf32, #tpu.memory_space<vmem>>, %arg12: memref<1x1x32xf32, #tpu.memory_space<vmem>>, %arg13: memref<1x1x32xf32, #tpu.memory_space<vmem>>, %arg14: memref<1x1x32xf32, #tpu.memory_space<vmem>>, %arg15: memref<1x32x64xf32, #tpu.memory_space<vmem>>, %arg16: memref<1x1x64xf32, #tpu.memory_space<vmem>>, %arg17: memref<1x64x32xf32, #tpu.memory_space<vmem>>, %arg18: memref<1x1x32xf32, #tpu.memory_space<vmem>>, %arg19: memref<32x64xf32, #tpu.memory_space<vmem>>, %arg20: memref<1x64xf32, #tpu.memory_space<vmem>>, %arg21: memref<64x128xf32, #tpu.memory_space<vmem>>, %arg22: memref<1x128xf32, #tpu.memory_space<vmem>>, %arg23: memref<2x128xf32, #tpu.memory_space<vmem>>, %arg24: memref<16x32xf32, #tpu.memory_space<vmem>>) attributes {dimension_semantics = [#tpu.dimension_semantics<arbitrary>], iteration_bounds = array<i64: 2>, scalar_prefetch = 0 : i64, scratch_operands = 1 : i64, tpu.core_type = #tpu.core_type<tc>, window_params = [{pipeline_mode = #tpu.pipeline_mode<synchronous>, transform_indices = @transform_0, window_bounds = array<i64: 2, 8, 256>}, {pipeline_mode = #tpu.pipeline_mode<synchronous>, transform_indices = @transform_1, window_bounds = array<i64: 2, 8, 256>}, {pipeline_mode = #tpu.pipeline_mode<synchronous>, transform_indices = @transform_2, window_bounds = array<i64: 256, 32>}, {pipeline_mode = #tpu.pipeline_mode<synchronous>, transform_indices = @transform_3, window_bounds = array<i64: 256, 32>}, {pipeline_mode = #tpu.pipeline_mode<synchronous>, transform_indices = @transform_4, window_bounds = array<i64: 1, 32>}, {pipeline_mode = #tpu.pipeline_mode<synchronous>, transform_indices = @transform_5, window_bounds = array<i64: 1, 32>}, {pipeline_mode = #tpu.pipeline_mode<synchronous>, transform_indices = @transform_6, window_bounds = array<i64: 8, 32>}, {transform_indices = @transform_7, window_bounds = array<i64: 1, 1, 32>}, {transform_indices = @transform_8, window_bounds = array<i64: 1, 1, 32>}, {transform_indices = @transform_9, window_bounds = array<i64: 1, 32, 48>}, {transform_indices = @transform_10, window_bounds = array<i64: 1, 16, 32>}, {transform_indices = @transform_11, window_bounds = array<i64: 1, 1, 32>}, {transform_indices = @transform_12, window_bounds = array<i64: 1, 1, 32>}, {transform_indices = @transform_13, window_bounds = array<i64: 1, 1, 32>}, {transform_indices = @transform_14, window_bounds = array<i64: 1, 32, 64>}, {transform_indices = @transform_15, window_bounds = array<i64: 1, 1, 64>}, {transform_indices = @transform_16, window_bounds = array<i64: 1, 64, 32>}, {transform_indices = @transform_17, window_bounds = array<i64: 1, 1, 32>}, {pipeline_mode = #tpu.pipeline_mode<synchronous>, transform_indices = @transform_18, window_bounds = array<i64: 32, 64>}, {pipeline_mode = #tpu.pipeline_mode<synchronous>, transform_indices = @transform_19, window_bounds = array<i64: 1, 64>}, {pipeline_mode = #tpu.pipeline_mode<synchronous>, transform_indices = @transform_20, window_bounds = array<i64: 64, 128>}, {pipeline_mode = #tpu.pipeline_mode<synchronous>, transform_indices = @transform_21, window_bounds = array<i64: 1, 128>}, {pipeline_mode = #tpu.pipeline_mode<synchronous>, transform_indices = @transform_22, window_bounds = array<i64: 2, 128>}]} {
    %0 = tpu.iota {dimensions = array<i32: 2>} : vector<1x1x8xi32>
    %c0_i32 = arith.constant 0 : i32
    %1 = arith.cmpi eq, %arg0, %c0_i32 : i32
    %2 = arith.extui %1 : i1 to i32
    %c0_i32_0 = arith.constant 0 : i32
    %3 = arith.cmpi ne, %2, %c0_i32_0 : i32
    scf.if %3 {
      %c0_69 = arith.constant 0 : index
      %c0_70 = arith.constant 0 : index
      %c0_71 = arith.constant 0 : index
      %153 = vector.load %arg1[%c0_69, %c0_70, %c0_71] : memref<2x8x256xf32, #tpu.memory_space<vmem>>, vector<2x8x256xf32>
      %c0_72 = arith.constant 0 : index
      %c0_73 = arith.constant 0 : index
      %c0_74 = arith.constant 0 : index
      %154 = vector.load %arg2[%c0_72, %c0_73, %c0_74] : memref<2x8x256xf32, #tpu.memory_space<vmem>>, vector<2x8x256xf32>
      "tpu.trace_start"() <{level = 10 : i32, message = "bqd,bkd->bqk"}> : () -> ()
      %cst_75 = arith.constant dense<0.000000e+00> : vector<2x8x8xf32>
      %155 = tpu.matmul %153, %154, %cst_75 {dimension_numbers = #tpu.dot_dimension_numbers<[2], [2], [1], [1], [0, 0, 0, 1, 1, 1], [0], [0]>} : vector<2x8x256xf32>, vector<2x8x256xf32>, vector<2x8x8xf32> -> vector<2x8x8xf32>
      "tpu.trace_stop"() : () -> ()
      %cst_76 = arith.constant 6.250000e-02 : f32
      %156 = vector.broadcast %cst_76 : f32 to vector<2x8x8xf32>
      %157 = arith.mulf %155, %156 : vector<2x8x8xf32>
      %c1_i32_77 = arith.constant 1 : i32
      %158 = vector.broadcast %c1_i32_77 : i32 to vector<1x1x8xi32>
      %159 = arith.cmpi sge, %0, %158 : vector<1x1x8xi32>
      %c4_i32 = arith.constant 4 : i32
      %160 = vector.broadcast %c4_i32 : i32 to vector<1x1x8xi32>
      %161 = arith.cmpi sle, %0, %160 : vector<1x1x8xi32>
      %162 = arith.andi %159, %161 : vector<1x1x8xi1>
      %cst_78 = arith.constant -1.000000e+30 : f32
      %163 = vector.shape_cast %162 : vector<1x1x8xi1> to vector<1x1x8xi1>
      %164 = vector.broadcast %163 : vector<1x1x8xi1> to vector<2x8x8xi1>
      %165 = vector.broadcast %cst_78 : f32 to vector<2x8x8xf32>
      %166 = arith.select %164, %157, %165 : vector<2x8x8xi1>, vector<2x8x8xf32>
      %cst_79 = arith.constant dense<0xFF800000> : vector<2x8xf32>
      %167 = vector.multi_reduction <maximumf>, %166, %cst_79 [2] : vector<2x8x8xf32> to vector<2x8xf32>
      %168 = vector.shape_cast %167 : vector<2x8xf32> to vector<2x8x1xf32>
      %169 = vector.broadcast %168 : vector<2x8x1xf32> to vector<2x8x8xf32>
      %170 = arith.subf %166, %169 : vector<2x8x8xf32>
      %171 = math.exp %170 : vector<2x8x8xf32>
      %cst_80 = arith.constant dense<0.000000e+00> : vector<2x8xf32>
      %172 = vector.multi_reduction <add>, %171, %cst_80 [2] : vector<2x8x8xf32> to vector<2x8xf32>
      %173 = vector.shape_cast %172 : vector<2x8xf32> to vector<2x8x1xf32>
      %174 = tpu.reciprocal %173 {approx = true} : vector<2x8x1xf32> -> vector<2x8x1xf32>
      %175 = vector.broadcast %174 : vector<2x8x1xf32> to vector<2x8x8xf32>
      %176 = arith.mulf %171, %175 : vector<2x8x8xf32>
      "tpu.trace_start"() <{level = 10 : i32, message = "bqk,bkd->bqd"}> : () -> ()
      %cst_81 = arith.constant dense<0.000000e+00> : vector<2x8x256xf32>
      %177 = tpu.matmul %176, %154, %cst_81 {dimension_numbers = #tpu.dot_dimension_numbers<[2], [1], [1], [2], [0, 0, 0, 1, 1, 2], [0], [0]>} : vector<2x8x8xf32>, vector<2x8x256xf32>, vector<2x8x256xf32> -> vector<2x8x256xf32>
      "tpu.trace_stop"() : () -> ()
      %178 = vector.shape_cast %153 : vector<2x8x256xf32> to vector<16x256xf32>
      %179 = vector.shape_cast %177 : vector<2x8x256xf32> to vector<16x256xf32>
      %c0_82 = arith.constant 0 : index
      %c0_83 = arith.constant 0 : index
      %180 = vector.load %arg3[%c0_82, %c0_83] : memref<256x32xf32, #tpu.memory_space<vmem>>, vector<256x32xf32>
      %cst_84 = arith.constant dense<0.000000e+00> : vector<16x32xf32>
      %181 = tpu.matmul %178, %180, %cst_84 {dimension_numbers = #tpu.dot_dimension_numbers<[1], [0], [0], [1], [0, 0, 1, 1], [], []>} : vector<16x256xf32>, vector<256x32xf32>, vector<16x32xf32> -> vector<16x32xf32>
      %c0_85 = arith.constant 0 : index
      %c0_86 = arith.constant 0 : index
      %182 = vector.load %arg4[%c0_85, %c0_86] : memref<256x32xf32, #tpu.memory_space<vmem>>, vector<256x32xf32>
      %cst_87 = arith.constant dense<0.000000e+00> : vector<16x32xf32>
      %183 = tpu.matmul %179, %182, %cst_87 {dimension_numbers = #tpu.dot_dimension_numbers<[1], [0], [0], [1], [0, 0, 1, 1], [], []>} : vector<16x256xf32>, vector<256x32xf32>, vector<16x32xf32> -> vector<16x32xf32>
      %184 = arith.addf %181, %183 : vector<16x32xf32>
      %c0_88 = arith.constant 0 : index
      %c0_89 = arith.constant 0 : index
      %185 = vector.load %arg5[%c0_88, %c0_89] : memref<1x32xf32, #tpu.memory_space<vmem>>, vector<1x32xf32>
      %186 = vector.broadcast %185 : vector<1x32xf32> to vector<16x32xf32>
      %187 = arith.addf %184, %186 : vector<16x32xf32>
      %188 = vector.shape_cast %187 : vector<16x32xf32> to vector<2x8x32xf32>
      %189 = tpu.iota {dimensions = array<i32: 1>} : vector<1x8x1xi32>
      %c0_90 = arith.constant 0 : index
      %c0_91 = arith.constant 0 : index
      %190 = vector.load %arg6[%c0_90, %c0_91] : memref<1x32xf32, #tpu.memory_space<vmem>>, vector<1x32xf32>
      %c0_92 = arith.constant 0 : index
      %c0_93 = arith.constant 0 : index
      %191 = vector.load %arg7[%c0_92, %c0_93] : memref<8x32xf32, #tpu.memory_space<vmem>>, vector<1x32xf32>
      %192 = arith.addf %190, %191 : vector<1x32xf32>
      %193 = vector.shape_cast %192 : vector<1x32xf32> to vector<1x1x32xf32>
      %c0_i32_94 = arith.constant 0 : i32
      %194 = vector.broadcast %c0_i32_94 : i32 to vector<1x8x1xi32>
      %195 = arith.cmpi eq, %189, %194 : vector<1x8x1xi32>
      %c0_95 = arith.constant 0 : index
      %c0_96 = arith.constant 0 : index
      %196 = vector.load %arg7[%c0_95, %c0_96] : memref<8x32xf32, #tpu.memory_space<vmem>>, vector<8x32xf32>
      %197 = vector.shape_cast %196 : vector<8x32xf32> to vector<1x8x32xf32>
      %198 = vector.broadcast %197 : vector<1x8x32xf32> to vector<2x8x32xf32>
      %199 = arith.addf %188, %198 : vector<2x8x32xf32>
      %200 = vector.shape_cast %195 : vector<1x8x1xi1> to vector<1x8x1xi1>
      %201 = vector.broadcast %200 : vector<1x8x1xi1> to vector<2x8x32xi1>
      %202 = vector.shape_cast %193 : vector<1x1x32xf32> to vector<1x1x32xf32>
      %203 = vector.broadcast %202 : vector<1x1x32xf32> to vector<2x8x32xf32>
      %204 = arith.select %201, %203, %199 : vector<2x8x32xi1>, vector<2x8x32xf32>
      %205 = vector.shape_cast %204 : vector<2x8x32xf32> to vector<16x32xf32>
      %c0_97 = arith.constant 0 : index
      %c0_98 = arith.constant 0 : index
      %206 = vector.load %arg24[%c0_97, %c0_98] : memref<16x32xf32, #tpu.memory_space<vmem>>, vector<16x32xf32>
      tpu.vector_store %arg24[%c0_97, %c0_98], %205 {strides = array<i32>} : memref<16x32xf32, #tpu.memory_space<vmem>>, vector<16x32xf32>,
    } else {
    }
    %c0 = arith.constant 0 : index
    %c0_1 = arith.constant 0 : index
    %4 = vector.load %arg24[%c0, %c0_1] : memref<16x32xf32, #tpu.memory_space<vmem>>, vector<16x32xf32>
    %c0_2 = arith.constant 0 : index
    %c0_3 = arith.constant 0 : index
    %c0_4 = arith.constant 0 : index
    %5 = vector.load %arg8[%c0_2, %c0_3, %c0_4] : memref<1x1x32xf32, #tpu.memory_space<vmem>>, vector<1x1x32xf32>
    %6 = vector.shape_cast %5 : vector<1x1x32xf32> to vector<1x32xf32>
    %c0_5 = arith.constant 0 : index
    %c0_6 = arith.constant 0 : index
    %c0_7 = arith.constant 0 : index
    %7 = vector.load %arg9[%c0_5, %c0_6, %c0_7] : memref<1x1x32xf32, #tpu.memory_space<vmem>>, vector<1x1x32xf32>
    %8 = vector.shape_cast %7 : vector<1x1x32xf32> to vector<1x32xf32>
    %cst = arith.constant dense<0.000000e+00> : vector<16xf32>
    %9 = vector.multi_reduction <add>, %4, %cst [1] : vector<16x32xf32> to vector<16xf32>
    %10 = vector.shape_cast %9 : vector<16xf32> to vector<16x1xf32>
    %cst_8 = arith.constant 3.200000e+01 : f32
    %11 = vector.broadcast %cst_8 : f32 to vector<16x1xf32>
    %12 = arith.divf %10, %11 : vector<16x1xf32>
    %13 = vector.broadcast %12 : vector<16x1xf32> to vector<16x32xf32>
    %14 = arith.subf %4, %13 : vector<16x32xf32>
    %15 = arith.mulf %14, %14 : vector<16x32xf32>
    %cst_9 = arith.constant dense<0.000000e+00> : vector<16xf32>
    %16 = vector.multi_reduction <add>, %15, %cst_9 [1] : vector<16x32xf32> to vector<16xf32>
    %17 = vector.shape_cast %16 : vector<16xf32> to vector<16x1xf32>
    %cst_10 = arith.constant 3.200000e+01 : f32
    %18 = vector.broadcast %cst_10 : f32 to vector<16x1xf32>
    %19 = arith.divf %17, %18 : vector<16x1xf32>
    %20 = vector.broadcast %12 : vector<16x1xf32> to vector<16x32xf32>
    %21 = arith.subf %4, %20 : vector<16x32xf32>
    %cst_11 = arith.constant 9.99999974E-6 : f32
    %22 = vector.broadcast %cst_11 : f32 to vector<16x1xf32>
    %23 = arith.addf %19, %22 : vector<16x1xf32>
    %24 = math.rsqrt %23 : vector<16x1xf32>
    %25 = vector.broadcast %24 : vector<16x1xf32> to vector<16x32xf32>
    %26 = arith.mulf %21, %25 : vector<16x32xf32>
    %27 = vector.broadcast %6 : vector<1x32xf32> to vector<16x32xf32>
    %28 = arith.mulf %26, %27 : vector<16x32xf32>
    %29 = vector.broadcast %8 : vector<1x32xf32> to vector<16x32xf32>
    %30 = arith.addf %28, %29 : vector<16x32xf32>
    %c0_12 = arith.constant 0 : index
    %c0_13 = arith.constant 0 : index
    %c0_14 = arith.constant 0 : index
    %31 = vector.load %arg10[%c0_12, %c0_13, %c0_14] : memref<1x32x48xf32, #tpu.memory_space<vmem>>, vector<1x32x48xf32>
    %32 = vector.shape_cast %31 : vector<1x32x48xf32> to vector<32x48xf32>
    %cst_15 = arith.constant dense<0.000000e+00> : vector<16x48xf32>
    %33 = tpu.matmul %30, %32, %cst_15 {dimension_numbers = #tpu.dot_dimension_numbers<[1], [0], [0], [1], [0, 0, 1, 1], [], []>} : vector<16x32xf32>, vector<32x48xf32>, vector<16x48xf32> -> vector<16x48xf32>
    %34 = vector.shape_cast %33 : vector<16x48xf32> to vector<2x8x48xf32>
    %c5_i32 = arith.constant 5 : i32
    %35 = vector.broadcast %c5_i32 : i32 to vector<1x1x8xi32>
    %36 = arith.cmpi slt, %0, %35 : vector<1x1x8xi32>
    %c0_16 = arith.constant 0 : index
    %c0_17 = arith.constant 0 : index
    %c0_18 = arith.constant 0 : index
    %37 = vector.load %arg11[%c0_16, %c0_17, %c0_18] : memref<1x16x32xf32, #tpu.memory_space<vmem>>, vector<1x16x32xf32>
    %38 = vector.shape_cast %37 : vector<1x16x32xf32> to vector<16x32xf32>
    %cst_19 = arith.constant 0.000000e+00 : f32
    %39 = vector.broadcast %cst_19 : f32 to vector<16x32xf32>
    %40 = vector.extract_strided_slice %34 {offsets = [0, 0, 0], sizes = [2, 8, 8], strides = [1, 1, 1]} : vector<2x8x48xf32> to vector<2x8x8xf32>
    %cst_20 = arith.constant 0.353553385 : f32
    %41 = vector.broadcast %cst_20 : f32 to vector<2x8x8xf32>
    %42 = arith.mulf %40, %41 : vector<2x8x8xf32>
    %43 = vector.extract_strided_slice %34 {offsets = [0, 0, 16], sizes = [2, 8, 8], strides = [1, 1, 1]} : vector<2x8x48xf32> to vector<2x8x8xf32>
    %44 = vector.extract_strided_slice %34 {offsets = [0, 0, 32], sizes = [2, 8, 8], strides = [1, 1, 1]} : vector<2x8x48xf32> to vector<2x8x8xf32>
    "tpu.trace_start"() <{level = 10 : i32, message = "bqd,bkd->bqk"}> : () -> ()
    %cst_21 = arith.constant dense<0.000000e+00> : vector<2x8x8xf32>
    %45 = tpu.matmul %42, %43, %cst_21 {dimension_numbers = #tpu.dot_dimension_numbers<[2], [2], [1], [1], [0, 0, 0, 1, 1, 1], [0], [0]>} : vector<2x8x8xf32>, vector<2x8x8xf32>, vector<2x8x8xf32> -> vector<2x8x8xf32>
    %cst_22 = arith.constant -1.000000e+30 : f32
    "tpu.trace_stop"() : () -> ()
    %46 = vector.shape_cast %36 : vector<1x1x8xi1> to vector<1x1x8xi1>
    %47 = vector.broadcast %46 : vector<1x1x8xi1> to vector<2x8x8xi1>
    %48 = vector.broadcast %cst_22 : f32 to vector<2x8x8xf32>
    %49 = arith.select %47, %45, %48 : vector<2x8x8xi1>, vector<2x8x8xf32>
    %cst_23 = arith.constant dense<0xFF800000> : vector<2x8xf32>
    %50 = vector.multi_reduction <maximumf>, %49, %cst_23 [2] : vector<2x8x8xf32> to vector<2x8xf32>
    %51 = vector.shape_cast %50 : vector<2x8xf32> to vector<2x8x1xf32>
    %52 = vector.broadcast %51 : vector<2x8x1xf32> to vector<2x8x8xf32>
    %53 = arith.subf %49, %52 : vector<2x8x8xf32>
    %54 = math.exp %53 : vector<2x8x8xf32>
    %cst_24 = arith.constant dense<0.000000e+00> : vector<2x8xf32>
    %55 = vector.multi_reduction <add>, %54, %cst_24 [2] : vector<2x8x8xf32> to vector<2x8xf32>
    %56 = vector.shape_cast %55 : vector<2x8xf32> to vector<2x8x1xf32>
    %57 = tpu.reciprocal %56 {approx = true} : vector<2x8x1xf32> -> vector<2x8x1xf32>
    %58 = vector.broadcast %57 : vector<2x8x1xf32> to vector<2x8x8xf32>
    %59 = arith.mulf %54, %58 : vector<2x8x8xf32>
    "tpu.trace_start"() <{level = 10 : i32, message = "bqk,bkd->bqd"}> : () -> ()
    %cst_25 = arith.constant dense<0.000000e+00> : vector<2x8x8xf32>
    %60 = tpu.matmul %59, %44, %cst_25 {dimension_numbers = #tpu.dot_dimension_numbers<[2], [1], [1], [2], [0, 0, 0, 1, 1, 2], [0], [0]>} : vector<2x8x8xf32>, vector<2x8x8xf32>, vector<2x8x8xf32> -> vector<2x8x8xf32>
    "tpu.trace_stop"() : () -> ()
    %61 = vector.shape_cast %60 : vector<2x8x8xf32> to vector<16x8xf32>
    %62 = vector.extract_strided_slice %38 {offsets = [0, 0], sizes = [8, 32], strides = [1, 1]} : vector<16x32xf32> to vector<8x32xf32>
    %cst_26 = arith.constant dense<0.000000e+00> : vector<16x32xf32>
    %63 = tpu.matmul %61, %62, %cst_26 {dimension_numbers = #tpu.dot_dimension_numbers<[1], [0], [0], [1], [0, 0, 1, 1], [], []>} : vector<16x8xf32>, vector<8x32xf32>, vector<16x32xf32> -> vector<16x32xf32>
    %64 = arith.addf %39, %63 : vector<16x32xf32>
    %65 = vector.extract_strided_slice %34 {offsets = [0, 0, 8], sizes = [2, 8, 8], strides = [1, 1, 1]} : vector<2x8x48xf32> to vector<2x8x8xf32>
    %cst_27 = arith.constant 0.353553385 : f32
    %66 = vector.broadcast %cst_27 : f32 to vector<2x8x8xf32>
    %67 = arith.mulf %65, %66 : vector<2x8x8xf32>
    %68 = vector.extract_strided_slice %34 {offsets = [0, 0, 24], sizes = [2, 8, 8], strides = [1, 1, 1]} : vector<2x8x48xf32> to vector<2x8x8xf32>
    %69 = vector.extract_strided_slice %34 {offsets = [0, 0, 40], sizes = [2, 8, 8], strides = [1, 1, 1]} : vector<2x8x48xf32> to vector<2x8x8xf32>
    "tpu.trace_start"() <{level = 10 : i32, message = "bqd,bkd->bqk"}> : () -> ()
    %cst_28 = arith.constant dense<0.000000e+00> : vector<2x8x8xf32>
    %70 = tpu.matmul %67, %68, %cst_28 {dimension_numbers = #tpu.dot_dimension_numbers<[2], [2], [1], [1], [0, 0, 0, 1, 1, 1], [0], [0]>} : vector<2x8x8xf32>, vector<2x8x8xf32>, vector<2x8x8xf32> -> vector<2x8x8xf32>
    %cst_29 = arith.constant -1.000000e+30 : f32
    "tpu.trace_stop"() : () -> ()
    %71 = vector.shape_cast %36 : vector<1x1x8xi1> to vector<1x1x8xi1>
    %72 = vector.broadcast %71 : vector<1x1x8xi1> to vector<2x8x8xi1>
    %73 = vector.broadcast %cst_29 : f32 to vector<2x8x8xf32>
    %74 = arith.select %72, %70, %73 : vector<2x8x8xi1>, vector<2x8x8xf32>
    %cst_30 = arith.constant dense<0xFF800000> : vector<2x8xf32>
    %75 = vector.multi_reduction <maximumf>, %74, %cst_30 [2] : vector<2x8x8xf32> to vector<2x8xf32>
    %76 = vector.shape_cast %75 : vector<2x8xf32> to vector<2x8x1xf32>
    %77 = vector.broadcast %76 : vector<2x8x1xf32> to vector<2x8x8xf32>
    %78 = arith.subf %74, %77 : vector<2x8x8xf32>
    %79 = math.exp %78 : vector<2x8x8xf32>
    %cst_31 = arith.constant dense<0.000000e+00> : vector<2x8xf32>
    %80 = vector.multi_reduction <add>, %79, %cst_31 [2] : vector<2x8x8xf32> to vector<2x8xf32>
    %81 = vector.shape_cast %80 : vector<2x8xf32> to vector<2x8x1xf32>
    %82 = tpu.reciprocal %81 {approx = true} : vector<2x8x1xf32> -> vector<2x8x1xf32>
    %83 = vector.broadcast %82 : vector<2x8x1xf32> to vector<2x8x8xf32>
    %84 = arith.mulf %79, %83 : vector<2x8x8xf32>
    "tpu.trace_start"() <{level = 10 : i32, message = "bqk,bkd->bqd"}> : () -> ()
    %cst_32 = arith.constant dense<0.000000e+00> : vector<2x8x8xf32>
    %85 = tpu.matmul %84, %69, %cst_32 {dimension_numbers = #tpu.dot_dimension_numbers<[2], [1], [1], [2], [0, 0, 0, 1, 1, 2], [0], [0]>} : vector<2x8x8xf32>, vector<2x8x8xf32>, vector<2x8x8xf32> -> vector<2x8x8xf32>
    "tpu.trace_stop"() : () -> ()
    %86 = vector.shape_cast %85 : vector<2x8x8xf32> to vector<16x8xf32>
    %87 = vector.extract_strided_slice %38 {offsets = [8, 0], sizes = [8, 32], strides = [1, 1]} : vector<16x32xf32> to vector<8x32xf32>
    %cst_33 = arith.constant dense<0.000000e+00> : vector<16x32xf32>
    %88 = tpu.matmul %86, %87, %cst_33 {dimension_numbers = #tpu.dot_dimension_numbers<[1], [0], [0], [1], [0, 0, 1, 1], [], []>} : vector<16x8xf32>, vector<8x32xf32>, vector<16x32xf32> -> vector<16x32xf32>
    %89 = arith.addf %64, %88 : vector<16x32xf32>
    %90 = arith.addf %4, %89 : vector<16x32xf32>
    %c0_34 = arith.constant 0 : index
    %c0_35 = arith.constant 0 : index
    %c0_36 = arith.constant 0 : index
    %91 = vector.load %arg12[%c0_34, %c0_35, %c0_36] : memref<1x1x32xf32, #tpu.memory_space<vmem>>, vector<1x1x32xf32>
    %92 = vector.shape_cast %91 : vector<1x1x32xf32> to vector<1x32xf32>
    %93 = vector.broadcast %92 : vector<1x32xf32> to vector<16x32xf32>
    %94 = arith.addf %90, %93 : vector<16x32xf32>
    %c0_37 = arith.constant 0 : index
    %c0_38 = arith.constant 0 : index
    %c0_39 = arith.constant 0 : index
    %95 = vector.load %arg13[%c0_37, %c0_38, %c0_39] : memref<1x1x32xf32, #tpu.memory_space<vmem>>, vector<1x1x32xf32>
    %96 = vector.shape_cast %95 : vector<1x1x32xf32> to vector<1x32xf32>
    %c0_40 = arith.constant 0 : index
    %c0_41 = arith.constant 0 : index
    %c0_42 = arith.constant 0 : index
    %97 = vector.load %arg14[%c0_40, %c0_41, %c0_42] : memref<1x1x32xf32, #tpu.memory_space<vmem>>, vector<1x1x32xf32>
    %98 = vector.shape_cast %97 : vector<1x1x32xf32> to vector<1x32xf32>
    %cst_43 = arith.constant dense<0.000000e+00> : vector<16xf32>
    %99 = vector.multi_reduction <add>, %94, %cst_43 [1] : vector<16x32xf32> to vector<16xf32>
    %100 = vector.shape_cast %99 : vector<16xf32> to vector<16x1xf32>
    %cst_44 = arith.constant 3.200000e+01 : f32
    %101 = vector.broadcast %cst_44 : f32 to vector<16x1xf32>
    %102 = arith.divf %100, %101 : vector<16x1xf32>
    %103 = vector.broadcast %102 : vector<16x1xf32> to vector<16x32xf32>
    %104 = arith.subf %94, %103 : vector<16x32xf32>
    %105 = arith.mulf %104, %104 : vector<16x32xf32>
    %cst_45 = arith.constant dense<0.000000e+00> : vector<16xf32>
    %106 = vector.multi_reduction <add>, %105, %cst_45 [1] : vector<16x32xf32> to vector<16xf32>
    %107 = vector.shape_cast %106 : vector<16xf32> to vector<16x1xf32>
    %cst_46 = arith.constant 3.200000e+01 : f32
    %108 = vector.broadcast %cst_46 : f32 to vector<16x1xf32>
    %109 = arith.divf %107, %108 : vector<16x1xf32>
    %110 = vector.broadcast %102 : vector<16x1xf32> to vector<16x32xf32>
    %111 = arith.subf %94, %110 : vector<16x32xf32>
    %cst_47 = arith.constant 9.99999974E-6 : f32
    %112 = vector.broadcast %cst_47 : f32 to vector<16x1xf32>
    %113 = arith.addf %109, %112 : vector<16x1xf32>
    %114 = math.rsqrt %113 : vector<16x1xf32>
    %115 = vector.broadcast %114 : vector<16x1xf32> to vector<16x32xf32>
    %116 = arith.mulf %111, %115 : vector<16x32xf32>
    %117 = vector.broadcast %96 : vector<1x32xf32> to vector<16x32xf32>
    %118 = arith.mulf %116, %117 : vector<16x32xf32>
    %119 = vector.broadcast %98 : vector<1x32xf32> to vector<16x32xf32>
    %120 = arith.addf %118, %119 : vector<16x32xf32>
    %c0_48 = arith.constant 0 : index
    %c0_49 = arith.constant 0 : index
    %c0_50 = arith.constant 0 : index
    %121 = vector.load %arg15[%c0_48, %c0_49, %c0_50] : memref<1x32x64xf32, #tpu.memory_space<vmem>>, vector<1x32x64xf32>
    %122 = vector.shape_cast %121 : vector<1x32x64xf32> to vector<32x64xf32>
    %cst_51 = arith.constant dense<0.000000e+00> : vector<16x64xf32>
    %123 = tpu.matmul %120, %122, %cst_51 {dimension_numbers = #tpu.dot_dimension_numbers<[1], [0], [0], [1], [0, 0, 1, 1], [], []>} : vector<16x32xf32>, vector<32x64xf32>, vector<16x64xf32> -> vector<16x64xf32>
    %c0_52 = arith.constant 0 : index
    %c0_53 = arith.constant 0 : index
    %c0_54 = arith.constant 0 : index
    %124 = vector.load %arg16[%c0_52, %c0_53, %c0_54] : memref<1x1x64xf32, #tpu.memory_space<vmem>>, vector<1x1x64xf32>
    %125 = vector.shape_cast %124 : vector<1x1x64xf32> to vector<1x64xf32>
    %126 = vector.broadcast %125 : vector<1x64xf32> to vector<16x64xf32>
    %127 = arith.addf %123, %126 : vector<16x64xf32>
    %cst_55 = arith.constant 5.000000e-01 : f32
    %128 = vector.broadcast %cst_55 : f32 to vector<16x64xf32>
    %129 = arith.mulf %128, %127 : vector<16x64xf32>
    %cst_56 = arith.constant 4.471500e-02 : f32
    %130 = vector.broadcast %cst_56 : f32 to vector<16x64xf32>
    %131 = arith.mulf %130, %127 : vector<16x64xf32>
    %132 = arith.mulf %131, %127 : vector<16x64xf32>
    %133 = arith.mulf %132, %127 : vector<16x64xf32>
    %134 = arith.addf %127, %133 : vector<16x64xf32>
    %cst_57 = arith.constant 0.797884583 : f32
    %135 = vector.broadcast %cst_57 : f32 to vector<16x64xf32>
    %136 = arith.mulf %135, %134 : vector<16x64xf32>
    %137 = math.tanh %136 : vector<16x64xf32>
    %cst_58 = arith.constant 1.000000e+00 : f32
    %138 = vector.broadcast %cst_58 : f32 to vector<16x64xf32>
    %139 = arith.addf %138, %137 : vector<16x64xf32>
    %140 = arith.mulf %129, %139 : vector<16x64xf32>
    %c0_59 = arith.constant 0 : index
    %c0_60 = arith.constant 0 : index
    %c0_61 = arith.constant 0 : index
    %141 = vector.load %arg17[%c0_59, %c0_60, %c0_61] : memref<1x64x32xf32, #tpu.memory_space<vmem>>, vector<1x64x32xf32>
    %142 = vector.shape_cast %141 : vector<1x64x32xf32> to vector<64x32xf32>
    %cst_62 = arith.constant dense<0.000000e+00> : vector<16x32xf32>
    %143 = tpu.matmul %140, %142, %cst_62 {dimension_numbers = #tpu.dot_dimension_numbers<[1], [0], [0], [1], [0, 0, 1, 1], [], []>} : vector<16x64xf32>, vector<64x32xf32>, vector<16x32xf32> -> vector<16x32xf32>
    %144 = arith.addf %94, %143 : vector<16x32xf32>
    %c0_63 = arith.constant 0 : index
    %c0_64 = arith.constant 0 : index
    %c0_65 = arith.constant 0 : index
    %145 = vector.load %arg18[%c0_63, %c0_64, %c0_65] : memref<1x1x32xf32, #tpu.memory_space<vmem>>, vector<1x1x32xf32>
    %146 = vector.shape_cast %145 : vector<1x1x32xf32> to vector<1x32xf32>
    %147 = vector.broadcast %146 : vector<1x32xf32> to vector<16x32xf32>
    %148 = arith.addf %144, %147 : vector<16x32xf32>
    %c0_66 = arith.constant 0 : index
    %c0_67 = arith.constant 0 : index
    %149 = vector.load %arg24[%c0_66, %c0_67] : memref<16x32xf32, #tpu.memory_space<vmem>>, vector<16x32xf32>
    tpu.vector_store %arg24[%c0_66, %c0_67], %148 {strides = array<i32>} : memref<16x32xf32, #tpu.memory_space<vmem>>, vector<16x32xf32>,
    %c1_i32 = arith.constant 1 : i32
    %150 = arith.cmpi eq, %arg0, %c1_i32 : i32
    %151 = arith.extui %150 : i1 to i32
    %c0_i32_68 = arith.constant 0 : i32
    %152 = arith.cmpi ne, %151, %c0_i32_68 : i32
    scf.if %152 {
      %153 = tpu.iota {dimensions = array<i32: 1>} : vector<2x16xi32>
      %154 = tpu.iota {dimensions = array<i32: 0>} : vector<2x16xi32>
      %c8_i32 = arith.constant 8 : i32
      %155 = vector.broadcast %c8_i32 : i32 to vector<2x16xi32>
      %156 = arith.muli %154, %155 : vector<2x16xi32>
      %157 = arith.cmpi eq, %153, %156 : vector<2x16xi32>
      %158 = arith.extui %157 : vector<2x16xi1> to vector<2x16xi32>
      %159 = arith.sitofp %158 : vector<2x16xi32> to vector<2x16xf32>
      %cst_69 = arith.constant dense<0.000000e+00> : vector<2x32xf32>
      %160 = tpu.matmul %159, %148, %cst_69 {dimension_numbers = #tpu.dot_dimension_numbers<[1], [0], [0], [1], [0, 0, 1, 1], [], []>} : vector<2x16xf32>, vector<16x32xf32>, vector<2x32xf32> -> vector<2x32xf32>
      %c0_70 = arith.constant 0 : index
      %c0_71 = arith.constant 0 : index
      %161 = vector.load %arg19[%c0_70, %c0_71] : memref<32x64xf32, #tpu.memory_space<vmem>>, vector<32x64xf32>
      %cst_72 = arith.constant dense<0.000000e+00> : vector<2x64xf32>
      %162 = tpu.matmul %160, %161, %cst_72 {dimension_numbers = #tpu.dot_dimension_numbers<[1], [0], [0], [1], [0, 0, 1, 1], [], []>} : vector<2x32xf32>, vector<32x64xf32>, vector<2x64xf32> -> vector<2x64xf32>
      %c0_73 = arith.constant 0 : index
      %c0_74 = arith.constant 0 : index
      %163 = vector.load %arg20[%c0_73, %c0_74] : memref<1x64xf32, #tpu.memory_space<vmem>>, vector<1x64xf32>
      %164 = vector.broadcast %163 : vector<1x64xf32> to vector<2x64xf32>
      %165 = arith.addf %162, %164 : vector<2x64xf32>
      %cst_75 = arith.constant 0.000000e+00 : f32
      %166 = vector.broadcast %cst_75 : f32 to vector<2x64xf32>
      %167 = arith.maximumf %165, %166 : vector<2x64xf32>
      %c0_76 = arith.constant 0 : index
      %c0_77 = arith.constant 0 : index
      %168 = vector.load %arg21[%c0_76, %c0_77] : memref<64x128xf32, #tpu.memory_space<vmem>>, vector<64x128xf32>
      %cst_78 = arith.constant dense<0.000000e+00> : vector<2x128xf32>
      %169 = tpu.matmul %167, %168, %cst_78 {dimension_numbers = #tpu.dot_dimension_numbers<[1], [0], [0], [1], [0, 0, 1, 1], [], []>} : vector<2x64xf32>, vector<64x128xf32>, vector<2x128xf32> -> vector<2x128xf32>
      %c0_79 = arith.constant 0 : index
      %c0_80 = arith.constant 0 : index
      %170 = vector.load %arg22[%c0_79, %c0_80] : memref<1x128xf32, #tpu.memory_space<vmem>>, vector<1x128xf32>
      %171 = vector.broadcast %170 : vector<1x128xf32> to vector<2x128xf32>
      %172 = arith.addf %169, %171 : vector<2x128xf32>
      %cst_81 = arith.constant 0.000000e+00 : f32
      %173 = vector.broadcast %cst_81 : f32 to vector<2x128xf32>
      %174 = arith.subf %173, %172 : vector<2x128xf32>
      %175 = math.exp %174 : vector<2x128xf32>
      %cst_82 = arith.constant 1.000000e+00 : f32
      %176 = vector.broadcast %cst_82 : f32 to vector<2x128xf32>
      %177 = arith.addf %176, %175 : vector<2x128xf32>
      %cst_83 = arith.constant 1.000000e+00 : f32
      %178 = vector.broadcast %cst_83 : f32 to vector<2x128xf32>
      %179 = arith.divf %178, %177 : vector<2x128xf32>
      %c0_84 = arith.constant 0 : index
      %c0_85 = arith.constant 0 : index
      %180 = vector.load %arg23[%c0_84, %c0_85] : memref<2x128xf32, #tpu.memory_space<vmem>>, vector<2x128xf32>
      tpu.vector_store %arg23[%c0_84, %c0_85], %179 {strides = array<i32>} : memref<2x128xf32, #tpu.memory_space<vmem>>, vector<2x128xf32>,
    } else {
    }
    return
  }
  func.func @transform_0(%arg0: i32) -> (i32, i32, i32) {
    %c0_i32 = arith.constant 0 : i32
    %c0_i32_0 = arith.constant 0 : i32
    %c0_i32_1 = arith.constant 0 : i32
    %c0_i32_2 = arith.constant 0 : i32
    return %c0_i32, %c0_i32_0, %c0_i32_1 : i32, i32, i32
  }
  func.func @transform_1(%arg0: i32) -> (i32, i32, i32) {
    %c0_i32 = arith.constant 0 : i32
    %c0_i32_0 = arith.constant 0 : i32
    %c0_i32_1 = arith.constant 0 : i32
    %c0_i32_2 = arith.constant 0 : i32
    return %c0_i32, %c0_i32_0, %c0_i32_1 : i32, i32, i32
  }
  func.func @transform_2(%arg0: i32) -> (i32, i32) {
    %c0_i32 = arith.constant 0 : i32
    %c0_i32_0 = arith.constant 0 : i32
    %c0_i32_1 = arith.constant 0 : i32
    return %c0_i32, %c0_i32_0 : i32, i32
  }
  func.func @transform_3(%arg0: i32) -> (i32, i32) {
    %c0_i32 = arith.constant 0 : i32
    %c0_i32_0 = arith.constant 0 : i32
    %c0_i32_1 = arith.constant 0 : i32
    return %c0_i32, %c0_i32_0 : i32, i32
  }
  func.func @transform_4(%arg0: i32) -> (i32, i32) {
    %c0_i32 = arith.constant 0 : i32
    %c0_i32_0 = arith.constant 0 : i32
    %c0_i32_1 = arith.constant 0 : i32
    return %c0_i32, %c0_i32_0 : i32, i32
  }
  func.func @transform_5(%arg0: i32) -> (i32, i32) {
    %c0_i32 = arith.constant 0 : i32
    %c0_i32_0 = arith.constant 0 : i32
    %c0_i32_1 = arith.constant 0 : i32
    return %c0_i32, %c0_i32_0 : i32, i32
  }
  func.func @transform_6(%arg0: i32) -> (i32, i32) {
    %c0_i32 = arith.constant 0 : i32
    %c0_i32_0 = arith.constant 0 : i32
    %c0_i32_1 = arith.constant 0 : i32
    return %c0_i32, %c0_i32_0 : i32, i32
  }
  func.func @transform_7(%arg0: i32) -> (i32, i32, i32) {
    %c0_i32 = arith.constant 0 : i32
    %c0_i32_0 = arith.constant 0 : i32
    %c0_i32_1 = arith.constant 0 : i32
    return %arg0, %c0_i32, %c0_i32_0 : i32, i32, i32
  }
  func.func @transform_8(%arg0: i32) -> (i32, i32, i32) {
    %c0_i32 = arith.constant 0 : i32
    %c0_i32_0 = arith.constant 0 : i32
    %c0_i32_1 = arith.constant 0 : i32
    return %arg0, %c0_i32, %c0_i32_0 : i32, i32, i32
  }
  func.func @transform_9(%arg0: i32) -> (i32, i32, i32) {
    %c0_i32 = arith.constant 0 : i32
    %c0_i32_0 = arith.constant 0 : i32
    %c0_i32_1 = arith.constant 0 : i32
    return %arg0, %c0_i32, %c0_i32_0 : i32, i32, i32
  }
  func.func @transform_10(%arg0: i32) -> (i32, i32, i32) {
    %c0_i32 = arith.constant 0 : i32
    %c0_i32_0 = arith.constant 0 : i32
    %c0_i32_1 = arith.constant 0 : i32
    return %arg0, %c0_i32, %c0_i32_0 : i32, i32, i32
  }
  func.func @transform_11(%arg0: i32) -> (i32, i32, i32) {
    %c0_i32 = arith.constant 0 : i32
    %c0_i32_0 = arith.constant 0 : i32
    %c0_i32_1 = arith.constant 0 : i32
    return %arg0, %c0_i32, %c0_i32_0 : i32, i32, i32
  }
  func.func @transform_12(%arg0: i32) -> (i32, i32, i32) {
    %c0_i32 = arith.constant 0 : i32
    %c0_i32_0 = arith.constant 0 : i32
    %c0_i32_1 = arith.constant 0 : i32
    return %arg0, %c0_i32, %c0_i32_0 : i32, i32, i32
  }
  func.func @transform_13(%arg0: i32) -> (i32, i32, i32) {
    %c0_i32 = arith.constant 0 : i32
    %c0_i32_0 = arith.constant 0 : i32
    %c0_i32_1 = arith.constant 0 : i32
    return %arg0, %c0_i32, %c0_i32_0 : i32, i32, i32
  }
  func.func @transform_14(%arg0: i32) -> (i32, i32, i32) {
    %c0_i32 = arith.constant 0 : i32
    %c0_i32_0 = arith.constant 0 : i32
    %c0_i32_1 = arith.constant 0 : i32
    return %arg0, %c0_i32, %c0_i32_0 : i32, i32, i32
  }
  func.func @transform_15(%arg0: i32) -> (i32, i32, i32) {
    %c0_i32 = arith.constant 0 : i32
    %c0_i32_0 = arith.constant 0 : i32
    %c0_i32_1 = arith.constant 0 : i32
    return %arg0, %c0_i32, %c0_i32_0 : i32, i32, i32
  }
  func.func @transform_16(%arg0: i32) -> (i32, i32, i32) {
    %c0_i32 = arith.constant 0 : i32
    %c0_i32_0 = arith.constant 0 : i32
    %c0_i32_1 = arith.constant 0 : i32
    return %arg0, %c0_i32, %c0_i32_0 : i32, i32, i32
  }
  func.func @transform_17(%arg0: i32) -> (i32, i32, i32) {
    %c0_i32 = arith.constant 0 : i32
    %c0_i32_0 = arith.constant 0 : i32
    %c0_i32_1 = arith.constant 0 : i32
    return %arg0, %c0_i32, %c0_i32_0 : i32, i32, i32
  }
  func.func @transform_18(%arg0: i32) -> (i32, i32) {
    %c0_i32 = arith.constant 0 : i32
    %c0_i32_0 = arith.constant 0 : i32
    %c0_i32_1 = arith.constant 0 : i32
    return %c0_i32, %c0_i32_0 : i32, i32
  }
  func.func @transform_19(%arg0: i32) -> (i32, i32) {
    %c0_i32 = arith.constant 0 : i32
    %c0_i32_0 = arith.constant 0 : i32
    %c0_i32_1 = arith.constant 0 : i32
    return %c0_i32, %c0_i32_0 : i32, i32
  }
  func.func @transform_20(%arg0: i32) -> (i32, i32) {
    %c0_i32 = arith.constant 0 : i32
    %c0_i32_0 = arith.constant 0 : i32
    %c0_i32_1 = arith.constant 0 : i32
    return %c0_i32, %c0_i32_0 : i32, i32
  }
  func.func @transform_21(%arg0: i32) -> (i32, i32) {
    %c0_i32 = arith.constant 0 : i32
    %c0_i32_0 = arith.constant 0 : i32
    %c0_i32_1 = arith.constant 0 : i32
    return %c0_i32, %c0_i32_0 : i32, i32
  }
  func.func @transform_22(%arg0: i32) -> (i32, i32) {
    %c0_i32 = arith.constant 0 : i32
    %c0_i32_0 = arith.constant 0 : i32
    %c0_i32_1 = arith.constant 0 : i32
    return %c0_i32, %c0_i32_0 : i32, i32
  }
}

</mosaic_0001>

<llo_original>
// kernel: dual_efficient_vit_v2_forward.1
$region0: #{dual_efficient_vit_v2_forward.1}
  #allocation0 [shape = 'u32[]', space=smem, size = 0x4, offset = 0x4, fixed_abs, tag = 'smem constant byte address 0x4 - core index']
  #allocation1 [shape = 'u32[72,128]{1,0:T(1,128)}', space=vmem, size = 0x9000, scoped, tag = 'internal scratch']
  #allocation2 [shape = 'f32[16,32]{1,0:T(8,128)}', space=vmem, size = 0x2000, scoped, tag = 'scratch operand']
  %s0 = inlined_call_operand.vmem [shape: f32[2,8,256], index: 0, kind: input, shape index: {}]
  %s1 = inlined_call_operand.vmem [shape: f32[2,8,256], index: 1, kind: input, shape index: {}]
  %s2 = inlined_call_operand.vmem [shape: f32[256,32], index: 2, kind: input, shape index: {}]
  %s3 = inlined_call_operand.vmem [shape: f32[256,32], index: 3, kind: input, shape index: {}]
  %s4 = inlined_call_operand.vmem [shape: f32[1,32], index: 4, kind: input, shape index: {}]
  %s5 = inlined_call_operand.vmem [shape: f32[1,32], index: 5, kind: input, shape index: {}]
  %s6 = inlined_call_operand.vmem [shape: f32[8,32], index: 6, kind: input, shape index: {}]
  %s7 = inlined_call_operand.vmem [shape: f32[2,1,32], index: 7, kind: input, shape index: {}]
  %s8 = inlined_call_operand.vmem [shape: f32[2,1,32], index: 8, kind: input, shape index: {}]
  %s9 = inlined_call_operand.vmem [shape: f32[2,32,48], index: 9, kind: input, shape index: {}]
  %s10 = inlined_call_operand.vmem [shape: f32[2,16,32], index: 10, kind: input, shape index: {}]
  %s11 = inlined_call_operand.vmem [shape: f32[2,1,32], index: 11, kind: input, shape index: {}]
  %s12 = inlined_call_operand.vmem [shape: f32[2,1,32], index: 12, kind: input, shape index: {}]
  %s13 = inlined_call_operand.vmem [shape: f32[2,1,32], index: 13, kind: input, shape index: {}]
  %s14 = inlined_call_operand.vmem [shape: f32[2,32,64], index: 14, kind: input, shape index: {}]
  %s15 = inlined_call_operand.vmem [shape: f32[2,1,64], index: 15, kind: input, shape index: {}]
  %s16 = inlined_call_operand.vmem [shape: f32[2,64,32], index: 16, kind: input, shape index: {}]
  %s17 = inlined_call_operand.vmem [shape: f32[2,1,32], index: 17, kind: input, shape index: {}]
  %s18 = inlined_call_operand.vmem [shape: f32[32,64], index: 18, kind: input, shape index: {}]
  %s19 = inlined_call_operand.vmem [shape: f32[1,64], index: 19, kind: input, shape index: {}]
  %s20 = inlined_call_operand.vmem [shape: f32[64,128], index: 20, kind: input, shape index: {}]
  %s21 = inlined_call_operand.vmem [shape: f32[1,128], index: 21, kind: input, shape index: {}]
  %s22 = inlined_call_operand.vmem [shape: f32[2,128], index: 22, kind: output, shape index: {}]
  %s23 = sld [smem:[#allocation0]]
  $region129: #{dual_efficient_vit_v2_forward.1} parent=0
    _
  %s25 = ssub.s32 1, %s23
  %s26 = scalar_select 0, %s25, %s23
  loop: start=0, step=1, limit=4
  $region2: #{dual_efficient_vit_v2_forward.1} parent=0 // loop_pre_header
    _
  $region3: #{dual_efficient_vit_v2_forward.1} parent=0 // loop_header
    %s28 = sphi 0, %s32
    %p29 = scmp.ge.s32.totalorder %s28, 4
    %s36 = sphi 0, %s36
    %s38 = sphi 0, %s36
    %s39 = sphi 0, %s38
    %s53 = sphi 0, %s39
    %s57 = sphi 0, %s57
    %s59 = sphi 0, %s57
    %s60 = sphi 0, %s59
    %s74 = sphi 0, %s60
    %s78 = sphi 0, %s78
    %s80 = sphi 0, %s78
    %s81 = sphi 0, %s80
    %s95 = sphi 0, %s81
    %s99 = sphi 0, %s99
    %s101 = sphi 0, %s99
    %s102 = sphi 0, %s101
    %s116 = sphi 0, %s102
    %s120 = sphi 0, %s120
    %s122 = sphi 0, %s120
    %s123 = sphi 0, %s122
    %s137 = sphi 0, %s123
    %s141 = sphi 0, %s141
    %s143 = sphi 0, %s141
    %s144 = sphi 0, %s143
    %s158 = sphi 0, %s144
    %s162 = sphi 0, %s162
    %s164 = sphi 0, %s162
    %s165 = sphi 0, %s164
    %s179 = sphi 0, %s165
    %s185 = sphi 0, %s187
    %s188 = sphi 0, %s185
    %s189 = sphi 0, %s188
    %s205 = sphi 0, %s189
    %s211 = sphi 0, %s213
    %s214 = sphi 0, %s211
    %s215 = sphi 0, %s214
    %s231 = sphi 0, %s215
    %s237 = sphi 0, %s239
    %s240 = sphi 0, %s237
    %s241 = sphi 0, %s240
    %s257 = sphi 0, %s241
    %s263 = sphi 0, %s265
    %s266 = sphi 0, %s263
    %s267 = sphi 0, %s266
    %s283 = sphi 0, %s267
    %s289 = sphi 0, %s291
    %s292 = sphi 0, %s289
    %s293 = sphi 0, %s292
    %s309 = sphi 0, %s293
    %s315 = sphi 0, %s317
    %s318 = sphi 0, %s315
    %s319 = sphi 0, %s318
    %s335 = sphi 0, %s319
    %s341 = sphi 0, %s343
    %s344 = sphi 0, %s341
    %s345 = sphi 0, %s344
    %s361 = sphi 0, %s345
    %s367 = sphi 0, %s369
    %s370 = sphi 0, %s367
    %s371 = sphi 0, %s370
    %s387 = sphi 0, %s371
    %s393 = sphi 0, %s395
    %s396 = sphi 0, %s393
    %s397 = sphi 0, %s396
    %s413 = sphi 0, %s397
    %s419 = sphi 0, %s421
    %s422 = sphi 0, %s419
    %s423 = sphi 0, %s422
    %s439 = sphi 0, %s423
    %s445 = sphi 0, %s447
    %s448 = sphi 0, %s445
    %s449 = sphi 0, %s448
    %s465 = sphi 0, %s449
    %s469 = sphi 0, %s469
    %s471 = sphi 0, %s469
    %s472 = sphi 0, %s471
    %s486 = sphi 0, %s472
    %s490 = sphi 0, %s490
    %s492 = sphi 0, %s490
    %s493 = sphi 0, %s492
    %s507 = sphi 0, %s493
    %s511 = sphi 0, %s511
    %s513 = sphi 0, %s511
    %s514 = sphi 0, %s513
    %s528 = sphi 0, %s514
    %s532 = sphi 0, %s532
    %s534 = sphi 0, %s532
    %s535 = sphi 0, %s534
    %s549 = sphi 0, %s535
    %s553 = sphi 0, %s553
    %s555 = sphi 0, %s553
    %s556 = sphi 0, %s555
    %s570 = sphi 0, %s556
  $region4: #{dual_efficient_vit_v2_forward.1} parent=0 // loop_header_branch
    %31 = sbr.rel (%p29) target = $region8
  $region5: #{dual_efficient_vit_v2_forward.1} parent=0 // loop_body
    %s33 = ssub.s32 %s28, 1
    %s34 = ssub.s32 %s28, 2
    %s35 = sadd.s32 %s28, 1
    %s37 = sadd.s32 %s36, 1
    %p40 = scmp.eq.s32.totalorder %s28, 1
    %p41 = scmp.ne.s32.totalorder %s36, %s38
    %p42 = scmp.eq.s32.totalorder %s28, 0
    %p43 = por %p41, %p42
    %p44 = scmp.ne.s32.totalorder %s36, %s38
    %p45 = scmp.eq.s32.totalorder %s33, 1
    %p46 = por %p44, %p45
    %p47 = scmp.ne.s32.totalorder %s38, %s39
    %p48 = scmp.eq.s32.totalorder %s33, 0
    %p49 = por %p47, %p48
    %p50 = scmp.ne.s32.totalorder %s38, %s39
    %p51 = scmp.eq.s32.totalorder %s34, 1
    %p52 = por %p50, %p51
    %p54 = scmp.ne.s32.totalorder %s39, %s53
    %p55 = scmp.eq.s32.totalorder %s34, 0
    %p56 = por %p54, %p55
    %s58 = sadd.s32 %s57, 1
    %p61 = scmp.eq.s32.totalorder %s28, 1
    %p62 = scmp.ne.s32.totalorder %s57, %s59
    %p63 = scmp.eq.s32.totalorder %s28, 0
    %p64 = por %p62, %p63
    %p65 = scmp.ne.s32.totalorder %s57, %s59
    %p66 = scmp.eq.s32.totalorder %s33, 1
    %p67 = por %p65, %p66
    %p68 = scmp.ne.s32.totalorder %s59, %s60
    %p69 = scmp.eq.s32.totalorder %s33, 0
    %p70 = por %p68, %p69
    %p71 = scmp.ne.s32.totalorder %s59, %s60
    %p72 = scmp.eq.s32.totalorder %s34, 1
    %p73 = por %p71, %p72
    %p75 = scmp.ne.s32.totalorder %s60, %s74
    %p76 = scmp.eq.s32.totalorder %s34, 0
    %p77 = por %p75, %p76
    %s79 = sadd.s32 %s78, 1
    %p82 = scmp.eq.s32.totalorder %s28, 1
    %p83 = scmp.ne.s32.totalorder %s78, %s80
    %p84 = scmp.eq.s32.totalorder %s28, 0
    %p85 = por %p83, %p84
    %p86 = scmp.ne.s32.totalorder %s78, %s80
    %p87 = scmp.eq.s32.totalorder %s33, 1
    %p88 = por %p86, %p87
    %p89 = scmp.ne.s32.totalorder %s80, %s81
    %p90 = scmp.eq.s32.totalorder %s33, 0
    %p91 = por %p89, %p90
    %p92 = scmp.ne.s32.totalorder %s80, %s81
    %p93 = scmp.eq.s32.totalorder %s34, 1
    %p94 = por %p92, %p93
    %p96 = scmp.ne.s32.totalorder %s81, %s95
    %p97 = scmp.eq.s32.totalorder %s34, 0
    %p98 = por %p96, %p97
    %s100 = sadd.s32 %s99, 1
    %p103 = scmp.eq.s32.totalorder %s28, 1
    %p104 = scmp.ne.s32.totalorder %s99, %s101
    %p105 = scmp.eq.s32.totalorder %s28, 0
    %p106 = por %p104, %p105
    %p107 = scmp.ne.s32.totalorder %s99, %s101
    %p108 = scmp.eq.s32.totalorder %s33, 1
    %p109 = por %p107, %p108
    %p110 = scmp.ne.s32.totalorder %s101, %s102
    %p111 = scmp.eq.s32.totalorder %s33, 0
    %p112 = por %p110, %p111
    %p113 = scmp.ne.s32.totalorder %s101, %s102
    %p114 = scmp.eq.s32.totalorder %s34, 1
    %p115 = por %p113, %p114
    %p117 = scmp.ne.s32.totalorder %s102, %s116
    %p118 = scmp.eq.s32.totalorder %s34, 0
    %p119 = por %p117, %p118
    %s121 = sadd.s32 %s120, 1
    %p124 = scmp.eq.s32.totalorder %s28, 1
    %p125 = scmp.ne.s32.totalorder %s120, %s122
    %p126 = scmp.eq.s32.totalorder %s28, 0
    %p127 = por %p125, %p126
    %p128 = scmp.ne.s32.totalorder %s120, %s122
    %p129 = scmp.eq.s32.totalorder %s33, 1
    %p130 = por %p128, %p129
    %p131 = scmp.ne.s32.totalorder %s122, %s123
    %p132 = scmp.eq.s32.totalorder %s33, 0
    %p133 = por %p131, %p132
    %p134 = scmp.ne.s32.totalorder %s122, %s123
    %p135 = scmp.eq.s32.totalorder %s34, 1
    %p136 = por %p134, %p135
    %p138 = scmp.ne.s32.totalorder %s123, %s137
    %p139 = scmp.eq.s32.totalorder %s34, 0
    %p140 = por %p138, %p139
    %s142 = sadd.s32 %s141, 1
    %p145 = scmp.eq.s32.totalorder %s28, 1
    %p146 = scmp.ne.s32.totalorder %s141, %s143
    %p147 = scmp.eq.s32.totalorder %s28, 0
    %p148 = por %p146, %p147
    %p149 = scmp.ne.s32.totalorder %s141, %s143
    %p150 = scmp.eq.s32.totalorder %s33, 1
    %p151 = por %p149, %p150
    %p152 = scmp.ne.s32.totalorder %s143, %s144
    %p153 = scmp.eq.s32.totalorder %s33, 0
    %p154 = por %p152, %p153
    %p155 = scmp.ne.s32.totalorder %s143, %s144
    %p156 = scmp.eq.s32.totalorder %s34, 1
    %p157 = por %p155, %p156
    %p159 = scmp.ne.s32.totalorder %s144, %s158
    %p160 = scmp.eq.s32.totalorder %s34, 0
    %p161 = por %p159, %p160
    %s163 = sadd.s32 %s162, 1
    %p166 = scmp.eq.s32.totalorder %s28, 1
    %p167 = scmp.ne.s32.totalorder %s162, %s164
    %p168 = scmp.eq.s32.totalorder %s28, 0
    %p169 = por %p167, %p168
    %p170 = scmp.ne.s32.totalorder %s162, %s164
    %p171 = scmp.eq.s32.totalorder %s33, 1
    %p172 = por %p170, %p171
    %p173 = scmp.ne.s32.totalorder %s164, %s165
    %p174 = scmp.eq.s32.totalorder %s33, 0
    %p175 = por %p173, %p174
    %p176 = scmp.ne.s32.totalorder %s164, %s165
    %p177 = scmp.eq.s32.totalorder %s34, 1
    %p178 = por %p176, %p177
    %p180 = scmp.ne.s32.totalorder %s165, %s179
    %p181 = scmp.eq.s32.totalorder %s34, 0
    %p182 = por %p180, %p181
    %s183 = ssub.s32 %s28, %s35
    %p184 = scmp.eq.s32.totalorder %s183, 0
    %s186 = sadd.s32 %s185, 1
    %s187 = scalar_select %p184, %s185, %s186
    %p190 = pneg %p184
    %p191 = scmp.eq.s32.totalorder %s28, 1
    %p192 = por %p190, %p191
    %p193 = scmp.ne.s32.totalorder %s185, %s188
    %p194 = scmp.eq.s32.totalorder %s28, 0
    %p195 = por %p193, %p194
    %p196 = scmp.ne.s32.totalorder %s185, %s188
    %p197 = scmp.eq.s32.totalorder %s33, 1
    %p198 = por %p196, %p197
    %p199 = scmp.ne.s32.totalorder %s188, %s189
    %p200 = scmp.eq.s32.totalorder %s33, 0
    %p201 = por %p199, %p200
    %p202 = scmp.ne.s32.totalorder %s188, %s189
    %p203 = scmp.eq.s32.totalorder %s34, 1
    %p204 = por %p202, %p203
    %p206 = scmp.ne.s32.totalorder %s189, %s205
    %p207 = scmp.eq.s32.totalorder %s34, 0
    %p208 = por %p206, %p207
    %s209 = ssub.s32 %s28, %s35
    %p210 = scmp.eq.s32.totalorder %s209, 0
    %s212 = sadd.s32 %s211, 1
    %s213 = scalar_select %p210, %s211, %s212
    %p216 = pneg %p210
    %p217 = scmp.eq.s32.totalorder %s28, 1
    %p218 = por %p216, %p217
    %p219 = scmp.ne.s32.totalorder %s211, %s214
    %p220 = scmp.eq.s32.totalorder %s28, 0
    %p221 = por %p219, %p220
    %p222 = scmp.ne.s32.totalorder %s211, %s214
    %p223 = scmp.eq.s32.totalorder %s33, 1
    %p224 = por %p222, %p223
    %p225 = scmp.ne.s32.totalorder %s214, %s215
    %p226 = scmp.eq.s32.totalorder %s33, 0
    %p227 = por %p225, %p226
    %p228 = scmp.ne.s32.totalorder %s214, %s215
    %p229 = scmp.eq.s32.totalorder %s34, 1
    %p230 = por %p228, %p229
    %p232 = scmp.ne.s32.totalorder %s215, %s231
    %p233 = scmp.eq.s32.totalorder %s34, 0
    %p234 = por %p232, %p233
    %s235 = ssub.s32 %s28, %s35
    %p236 = scmp.eq.s32.totalorder %s235, 0
    %s238 = sadd.s32 %s237, 1
    %s239 = scalar_select %p236, %s237, %s238
    %p242 = pneg %p236
    %p243 = scmp.eq.s32.totalorder %s28, 1
    %p244 = por %p242, %p243
    %p245 = scmp.ne.s32.totalorder %s237, %s240
    %p246 = scmp.eq.s32.totalorder %s28, 0
    %p247 = por %p245, %p246
    %p248 = scmp.ne.s32.totalorder %s237, %s240
    %p249 = scmp.eq.s32.totalorder %s33, 1
    %p250 = por %p248, %p249
    %p251 = scmp.ne.s32.totalorder %s240, %s241
    %p252 = scmp.eq.s32.totalorder %s33, 0
    %p253 = por %p251, %p252
    %p254 = scmp.ne.s32.totalorder %s240, %s241
    %p255 = scmp.eq.s32.totalorder %s34, 1
    %p256 = por %p254, %p255
    %p258 = scmp.ne.s32.totalorder %s241, %s257
    %p259 = scmp.eq.s32.totalorder %s34, 0
    %p260 = por %p258, %p259
    %s261 = ssub.s32 %s28, %s35
    %p262 = scmp.eq.s32.totalorder %s261, 0
    %s264 = sadd.s32 %s263, 1
    %s265 = scalar_select %p262, %s263, %s264
    %p268 = pneg %p262
    %p269 = scmp.eq.s32.totalorder %s28, 1
    %p270 = por %p268, %p269
    %p271 = scmp.ne.s32.totalorder %s263, %s266
    %p272 = scmp.eq.s32.totalorder %s28, 0
    %p273 = por %p271, %p272
    %p274 = scmp.ne.s32.totalorder %s263, %s266
    %p275 = scmp.eq.s32.totalorder %s33, 1
    %p276 = por %p274, %p275
    %p277 = scmp.ne.s32.totalorder %s266, %s267
    %p278 = scmp.eq.s32.totalorder %s33, 0
    %p279 = por %p277, %p278
    %p280 = scmp.ne.s32.totalorder %s266, %s267
    %p281 = scmp.eq.s32.totalorder %s34, 1
    %p282 = por %p280, %p281
    %p284 = scmp.ne.s32.totalorder %s267, %s283
    %p285 = scmp.eq.s32.totalorder %s34, 0
    %p286 = por %p284, %p285
    %s287 = ssub.s32 %s28, %s35
    %p288 = scmp.eq.s32.totalorder %s287, 0
    %s290 = sadd.s32 %s289, 1
    %s291 = scalar_select %p288, %s289, %s290
    %p294 = pneg %p288
    %p295 = scmp.eq.s32.totalorder %s28, 1
    %p296 = por %p294, %p295
    %p297 = scmp.ne.s32.totalorder %s289, %s292
    %p298 = scmp.eq.s32.totalorder %s28, 0
    %p299 = por %p297, %p298
    %p300 = scmp.ne.s32.totalorder %s289, %s292
    %p301 = scmp.eq.s32.totalorder %s33, 1
    %p302 = por %p300, %p301
    %p303 = scmp.ne.s32.totalorder %s292, %s293
    %p304 = scmp.eq.s32.totalorder %s33, 0
    %p305 = por %p303, %p304
    %p306 = scmp.ne.s32.totalorder %s292, %s293
    %p307 = scmp.eq.s32.totalorder %s34, 1
    %p308 = por %p306, %p307
    %p310 = scmp.ne.s32.totalorder %s293, %s309
    %p311 = scmp.eq.s32.totalorder %s34, 0
    %p312 = por %p310, %p311
    %s313 = ssub.s32 %s28, %s35
    %p314 = scmp.eq.s32.totalorder %s313, 0
    %s316 = sadd.s32 %s315, 1
    %s317 = scalar_select %p314, %s315, %s316
    %p320 = pneg %p314
    %p321 = scmp.eq.s32.totalorder %s28, 1
    %p322 = por %p320, %p321
    %p323 = scmp.ne.s32.totalorder %s315, %s318
    %p324 = scmp.eq.s32.totalorder %s28, 0
    %p325 = por %p323, %p324
    %p326 = scmp.ne.s32.totalorder %s315, %s318
    %p327 = scmp.eq.s32.totalorder %s33, 1
    %p328 = por %p326, %p327
    %p329 = scmp.ne.s32.totalorder %s318, %s319
    %p330 = scmp.eq.s32.totalorder %s33, 0
    %p331 = por %p329, %p330
    %p332 = scmp.ne.s32.totalorder %s318, %s319
    %p333 = scmp.eq.s32.totalorder %s34, 1
    %p334 = por %p332, %p333
    %p336 = scmp.ne.s32.totalorder %s319, %s335
    %p337 = scmp.eq.s32.totalorder %s34, 0
    %p338 = por %p336, %p337
    %s339 = ssub.s32 %s28, %s35
    %p340 = scmp.eq.s32.totalorder %s339, 0
    %s342 = sadd.s32 %s341, 1
    %s343 = scalar_select %p340, %s341, %s342
    %p346 = pneg %p340
    %p347 = scmp.eq.s32.totalorder %s28, 1
    %p348 = por %p346, %p347
    %p349 = scmp.ne.s32.totalorder %s341, %s344
    %p350 = scmp.eq.s32.totalorder %s28, 0
    %p351 = por %p349, %p350
    %p352 = scmp.ne.s32.totalorder %s341, %s344
    %p353 = scmp.eq.s32.totalorder %s33, 1
    %p354 = por %p352, %p353
    %p355 = scmp.ne.s32.totalorder %s344, %s345
    %p356 = scmp.eq.s32.totalorder %s33, 0
    %p357 = por %p355, %p356
    %p358 = scmp.ne.s32.totalorder %s344, %s345
    %p359 = scmp.eq.s32.totalorder %s34, 1
    %p360 = por %p358, %p359
    %p362 = scmp.ne.s32.totalorder %s345, %s361
    %p363 = scmp.eq.s32.totalorder %s34, 0
    %p364 = por %p362, %p363
    %s365 = ssub.s32 %s28, %s35
    %p366 = scmp.eq.s32.totalorder %s365, 0
    %s368 = sadd.s32 %s367, 1
    %s369 = scalar_select %p366, %s367, %s368
    %p372 = pneg %p366
    %p373 = scmp.eq.s32.totalorder %s28, 1
    %p374 = por %p372, %p373
    %p375 = scmp.ne.s32.totalorder %s367, %s370
    %p376 = scmp.eq.s32.totalorder %s28, 0
    %p377 = por %p375, %p376
    %p378 = scmp.ne.s32.totalorder %s367, %s370
    %p379 = scmp.eq.s32.totalorder %s33, 1
    %p380 = por %p378, %p379
    %p381 = scmp.ne.s32.totalorder %s370, %s371
    %p382 = scmp.eq.s32.totalorder %s33, 0
    %p383 = por %p381, %p382
    %p384 = scmp.ne.s32.totalorder %s370, %s371
    %p385 = scmp.eq.s32.totalorder %s34, 1
    %p386 = por %p384, %p385
    %p388 = scmp.ne.s32.totalorder %s371, %s387
    %p389 = scmp.eq.s32.totalorder %s34, 0
    %p390 = por %p388, %p389
    %s391 = ssub.s32 %s28, %s35
    %p392 = scmp.eq.s32.totalorder %s391, 0
    %s394 = sadd.s32 %s393, 1
    %s395 = scalar_select %p392, %s393, %s394
    %p398 = pneg %p392
    %p399 = scmp.eq.s32.totalorder %s28, 1
    %p400 = por %p398, %p399
    %p401 = scmp.ne.s32.totalorder %s393, %s396
    %p402 = scmp.eq.s32.totalorder %s28, 0
    %p403 = por %p401, %p402
    %p404 = scmp.ne.s32.totalorder %s393, %s396
    %p405 = scmp.eq.s32.totalorder %s33, 1
    %p406 = por %p404, %p405
    %p407 = scmp.ne.s32.totalorder %s396, %s397
    %p408 = scmp.eq.s32.totalorder %s33, 0
    %p409 = por %p407, %p408
    %p410 = scmp.ne.s32.totalorder %s396, %s397
    %p411 = scmp.eq.s32.totalorder %s34, 1
    %p412 = por %p410, %p411
    %p414 = scmp.ne.s32.totalorder %s397, %s413
    %p415 = scmp.eq.s32.totalorder %s34, 0
    %p416 = por %p414, %p415
    %s417 = ssub.s32 %s28, %s35
    %p418 = scmp.eq.s32.totalorder %s417, 0
    %s420 = sadd.s32 %s419, 1
    %s421 = scalar_select %p418, %s419, %s420
    %p424 = pneg %p418
    %p425 = scmp.eq.s32.totalorder %s28, 1
    %p426 = por %p424, %p425
    %p427 = scmp.ne.s32.totalorder %s419, %s422
    %p428 = scmp.eq.s32.totalorder %s28, 0
    %p429 = por %p427, %p428
    %p430 = scmp.ne.s32.totalorder %s419, %s422
    %p431 = scmp.eq.s32.totalorder %s33, 1
    %p432 = por %p430, %p431
    %p433 = scmp.ne.s32.totalorder %s422, %s423
    %p434 = scmp.eq.s32.totalorder %s33, 0
    %p435 = por %p433, %p434
    %p436 = scmp.ne.s32.totalorder %s422, %s423
    %p437 = scmp.eq.s32.totalorder %s34, 1
    %p438 = por %p436, %p437
    %p440 = scmp.ne.s32.totalorder %s423, %s439
    %p441 = scmp.eq.s32.totalorder %s34, 0
    %p442 = por %p440, %p441
    %s443 = ssub.s32 %s28, %s35
    %p444 = scmp.eq.s32.totalorder %s443, 0
    %s446 = sadd.s32 %s445, 1
    %s447 = scalar_select %p444, %s445, %s446
    %p450 = pneg %p444
    %p451 = scmp.eq.s32.totalorder %s28, 1
    %p452 = por %p450, %p451
    %p453 = scmp.ne.s32.totalorder %s445, %s448
    %p454 = scmp.eq.s32.totalorder %s28, 0
    %p455 = por %p453, %p454
    %p456 = scmp.ne.s32.totalorder %s445, %s448
    %p457 = scmp.eq.s32.totalorder %s33, 1
    %p458 = por %p456, %p457
    %p459 = scmp.ne.s32.totalorder %s448, %s449
    %p460 = scmp.eq.s32.totalorder %s33, 0
    %p461 = por %p459, %p460
    %p462 = scmp.ne.s32.totalorder %s448, %s449
    %p463 = scmp.eq.s32.totalorder %s34, 1
    %p464 = por %p462, %p463
    %p466 = scmp.ne.s32.totalorder %s449, %s465
    %p467 = scmp.eq.s32.totalorder %s34, 0
    %p468 = por %p466, %p467
    %s470 = sadd.s32 %s469, 1
    %p473 = scmp.eq.s32.totalorder %s28, 1
    %p474 = scmp.ne.s32.totalorder %s469, %s471
    %p475 = scmp.eq.s32.totalorder %s28, 0
    %p476 = por %p474, %p475
    %p477 = scmp.ne.s32.totalorder %s469, %s471
    %p478 = scmp.eq.s32.totalorder %s33, 1
    %p479 = por %p477, %p478
    %p480 = scmp.ne.s32.totalorder %s471, %s472
    %p481 = scmp.eq.s32.totalorder %s33, 0
    %p482 = por %p480, %p481
    %p483 = scmp.ne.s32.totalorder %s471, %s472
    %p484 = scmp.eq.s32.totalorder %s34, 1
    %p485 = por %p483, %p484
    %p487 = scmp.ne.s32.totalorder %s472, %s486
    %p488 = scmp.eq.s32.totalorder %s34, 0
    %p489 = por %p487, %p488
    %s491 = sadd.s32 %s490, 1
    %p494 = scmp.eq.s32.totalorder %s28, 1
    %p495 = scmp.ne.s32.totalorder %s490, %s492
    %p496 = scmp.eq.s32.totalorder %s28, 0
    %p497 = por %p495, %p496
    %p498 = scmp.ne.s32.totalorder %s490, %s492
    %p499 = scmp.eq.s32.totalorder %s33, 1
    %p500 = por %p498, %p499
    %p501 = scmp.ne.s32.totalorder %s492, %s493
    %p502 = scmp.eq.s32.totalorder %s33, 0
    %p503 = por %p501, %p502
    %p504 = scmp.ne.s32.totalorder %s492, %s493
    %p505 = scmp.eq.s32.totalorder %s34, 1
    %p506 = por %p504, %p505
    %p508 = scmp.ne.s32.totalorder %s493, %s507
    %p509 = scmp.eq.s32.totalorder %s34, 0
    %p510 = por %p508, %p509
    %s512 = sadd.s32 %s511, 1
    %p515 = scmp.eq.s32.totalorder %s28, 1
    %p516 = scmp.ne.s32.totalorder %s511, %s513
    %p517 = scmp.eq.s32.totalorder %s28, 0
    %p518 = por %p516, %p517
    %p519 = scmp.ne.s32.totalorder %s511, %s513
    %p520 = scmp.eq.s32.totalorder %s33, 1
    %p521 = por %p519, %p520
    %p522 = scmp.ne.s32.totalorder %s513, %s514
    %p523 = scmp.eq.s32.totalorder %s33, 0
    %p524 = por %p522, %p523
    %p525 = scmp.ne.s32.totalorder %s513, %s514
    %p526 = scmp.eq.s32.totalorder %s34, 1
    %p527 = por %p525, %p526
    %p529 = scmp.ne.s32.totalorder %s514, %s528
    %p530 = scmp.eq.s32.totalorder %s34, 0
    %p531 = por %p529, %p530
    %s533 = sadd.s32 %s532, 1
    %p536 = scmp.eq.s32.totalorder %s28, 1
    %p537 = scmp.ne.s32.totalorder %s532, %s534
    %p538 = scmp.eq.s32.totalorder %s28, 0
    %p539 = por %p537, %p538
    %p540 = scmp.ne.s32.totalorder %s532, %s534
    %p541 = scmp.eq.s32.totalorder %s33, 1
    %p542 = por %p540, %p541
    %p543 = scmp.ne.s32.totalorder %s534, %s535
    %p544 = scmp.eq.s32.totalorder %s33, 0
    %p545 = por %p543, %p544
    %p546 = scmp.ne.s32.totalorder %s534, %s535
    %p547 = scmp.eq.s32.totalorder %s34, 1
    %p548 = por %p546, %p547
    %p550 = scmp.ne.s32.totalorder %s535, %s549
    %p551 = scmp.eq.s32.totalorder %s34, 0
    %p552 = por %p550, %p551
    %s554 = sadd.s32 %s553, 1
    %p557 = scmp.eq.s32.totalorder %s28, 1
    %p558 = scmp.ne.s32.totalorder %s553, %s555
    %p559 = scmp.eq.s32.totalorder %s28, 0
    %p560 = por %p558, %p559
    %p561 = scmp.ne.s32.totalorder %s553, %s555
    %p562 = scmp.eq.s32.totalorder %s33, 1
    %p563 = por %p561, %p562
    %p564 = scmp.ne.s32.totalorder %s555, %s556
    %p565 = scmp.eq.s32.totalorder %s33, 0
    %p566 = por %p564, %p565
    %p567 = scmp.ne.s32.totalorder %s555, %s556
    %p568 = scmp.eq.s32.totalorder %s34, 1
    %p569 = por %p567, %p568
    %p571 = scmp.ne.s32.totalorder %s556, %s570
    %p572 = scmp.eq.s32.totalorder %s34, 0
    %p573 = por %p571, %p572
    %p574 = scmp.le.s32.totalorder 1, %s28
    %p575 = scmp.lt.s32.totalorder %s28, 3
    %p576 = pnand %p574, %p575
    %p577 = pneg %p576
    // Predicated region
    $region9: #{dual_efficient_vit_v2_forward.1} parent=5 // pred_check
      _
    $region10: #{dual_efficient_vit_v2_forward.1} parent=5 // pred_check_branch
      %579 = sbr.rel (%p576) target = $region12
    $region11: #{dual_efficient_vit_v2_forward.1} parent=5 // pred_region
      %s580 = ssub.s32 %s28, 1
      // Predicated region
      $region13: #{dual_efficient_vit_v2_forward.1} parent=11 // pred_check
        %p581 = pneg %p49
      $region14: #{dual_efficient_vit_v2_forward.1} parent=11 // pred_check_branch
        %583 = sbr.rel (%p581) target = $region16
      $region15: #{dual_efficient_vit_v2_forward.1} parent=11 // pred_region
        _
      $region16: #{dual_efficient_vit_v2_forward.1} parent=11 // pred_fallthru
        _
      // Predicated region
      $region17: #{dual_efficient_vit_v2_forward.1} parent=11 // pred_check
        %p584 = pneg %p70
      $region18: #{dual_efficient_vit_v2_forward.1} parent=11 // pred_check_branch
        %586 = sbr.rel (%p584) target = $region20
      $region19: #{dual_efficient_vit_v2_forward.1} parent=11 // pred_region
        _
      $region20: #{dual_efficient_vit_v2_forward.1} parent=11 // pred_fallthru
        _
      // Predicated region
      $region21: #{dual_efficient_vit_v2_forward.1} parent=11 // pred_check
        %p587 = pneg %p91
      $region22: #{dual_efficient_vit_v2_forward.1} parent=11 // pred_check_branch
        %589 = sbr.rel (%p587) target = $region24
      $region23: #{dual_efficient_vit_v2_forward.1} parent=11 // pred_region
        _
      $region24: #{dual_efficient_vit_v2_forward.1} parent=11 // pred_fallthru
        _
      // Predicated region
      $region25: #{dual_efficient_vit_v2_forward.1} parent=11 // pred_check
        %p590 = pneg %p112
      $region26: #{dual_efficient_vit_v2_forward.1} parent=11 // pred_check_branch
        %592 = sbr.rel (%p590) target = $region28
      $region27: #{dual_efficient_vit_v2_forward.1} parent=11 // pred_region
        _
      $region28: #{dual_efficient_vit_v2_forward.1} parent=11 // pred_fallthru
        _
      // Predicated region
      $region29: #{dual_efficient_vit_v2_forward.1} parent=11 // pred_check
        %p593 = pneg %p133
      $region30: #{dual_efficient_vit_v2_forward.1} parent=11 // pred_check_branch
        %595 = sbr.rel (%p593) target = $region32
      $region31: #{dual_efficient_vit_v2_forward.1} parent=11 // pred_region
        _
      $region32: #{dual_efficient_vit_v2_forward.1} parent=11 // pred_fallthru
        _
      // Predicated region
      $region33: #{dual_efficient_vit_v2_forward.1} parent=11 // pred_check
        %p596 = pneg %p154
      $region34: #{dual_efficient_vit_v2_forward.1} parent=11 // pred_check_branch
        %598 = sbr.rel (%p596) target = $region36
      $region35: #{dual_efficient_vit_v2_forward.1} parent=11 // pred_region
        _
      $region36: #{dual_efficient_vit_v2_forward.1} parent=11 // pred_fallthru
        _
      // Predicated region
      $region37: #{dual_efficient_vit_v2_forward.1} parent=11 // pred_check
        %p599 = pneg %p175
      $region38: #{dual_efficient_vit_v2_forward.1} parent=11 // pred_check_branch
        %601 = sbr.rel (%p599) target = $region40
      $region39: #{dual_efficient_vit_v2_forward.1} parent=11 // pred_region
        _
      $region40: #{dual_efficient_vit_v2_forward.1} parent=11 // pred_fallthru
        _
      // Predicated region
      $region41: #{dual_efficient_vit_v2_forward.1} parent=11 // pred_check
        %p602 = pneg %p482
      $region42: #{dual_efficient_vit_v2_forward.1} parent=11 // pred_check_branch
        %604 = sbr.rel (%p602) target = $region44
      $region43: #{dual_efficient_vit_v2_forward.1} parent=11 // pred_region
        _
      $region44: #{dual_efficient_vit_v2_forward.1} parent=11 // pred_fallthru
        _
      // Predicated region
      $region45: #{dual_efficient_vit_v2_forward.1} parent=11 // pred_check
        %p605 = pneg %p503
      $region46: #{dual_efficient_vit_v2_forward.1} parent=11 // pred_check_branch
        %607 = sbr.rel (%p605) target = $region48
      $region47: #{dual_efficient_vit_v2_forward.1} parent=11 // pred_region
        _
      $region48: #{dual_efficient_vit_v2_forward.1} parent=11 // pred_fallthru
        _
      // Predicated region
      $region49: #{dual_efficient_vit_v2_forward.1} parent=11 // pred_check
        %p608 = pneg %p524
      $region50: #{dual_efficient_vit_v2_forward.1} parent=11 // pred_check_branch
        %610 = sbr.rel (%p608) target = $region52
      $region51: #{dual_efficient_vit_v2_forward.1} parent=11 // pred_region
        _
      $region52: #{dual_efficient_vit_v2_forward.1} parent=11 // pred_fallthru
        _
      // Predicated region
      $region53: #{dual_efficient_vit_v2_forward.1} parent=11 // pred_check
        %p611 = pneg %p545
      $region54: #{dual_efficient_vit_v2_forward.1} parent=11 // pred_check_branch
        %613 = sbr.rel (%p611) target = $region56
      $region55: #{dual_efficient_vit_v2_forward.1} parent=11 // pred_region
        _
      $region56: #{dual_efficient_vit_v2_forward.1} parent=11 // pred_fallthru
        _
    $region12: #{dual_efficient_vit_v2_forward.1} parent=5 // pred_fallthru
      _
    %p614 = scmp.lt.s32.totalorder %s28, 2
    // Predicated region
    $region57: #{dual_efficient_vit_v2_forward.1} parent=5 // pred_check
      %p615 = pneg %p614
    $region58: #{dual_efficient_vit_v2_forward.1} parent=5 // pred_check_branch
      %617 = sbr.rel (%p615) target = $region60
    $region59: #{dual_efficient_vit_v2_forward.1} parent=5 // pred_region
      // Predicated region
      $region61: #{dual_efficient_vit_v2_forward.1} parent=59 // pred_check
        %p618 = pneg %p195
      $region62: #{dual_efficient_vit_v2_forward.1} parent=59 // pred_check_branch
        %620 = sbr.rel (%p618) target = $region64
      $region63: #{dual_efficient_vit_v2_forward.1} parent=59 // pred_region
        %p621 = scmp.lt.s32.totalorder %s28, 1
        %s622 = scalar_select %p621, %s28, 1
        %s623 = scalar_lea.vmem %s7, %s622
      $region64: #{dual_efficient_vit_v2_forward.1} parent=59 // pred_fallthru
        _
      // Predicated region
      $region65: #{dual_efficient_vit_v2_forward.1} parent=59 // pred_check
        %p624 = pneg %p221
      $region66: #{dual_efficient_vit_v2_forward.1} parent=59 // pred_check_branch
        %626 = sbr.rel (%p624) target = $region68
      $region67: #{dual_efficient_vit_v2_forward.1} parent=59 // pred_region
        %p627 = scmp.lt.s32.totalorder %s28, 1
        %s628 = scalar_select %p627, %s28, 1
        %s629 = scalar_lea.vmem %s8, %s628
      $region68: #{dual_efficient_vit_v2_forward.1} parent=59 // pred_fallthru
        _
      // Predicated region
      $region69: #{dual_efficient_vit_v2_forward.1} parent=59 // pred_check
        %p630 = pneg %p247
      $region70: #{dual_efficient_vit_v2_forward.1} parent=59 // pred_check_branch
        %632 = sbr.rel (%p630) target = $region72
      $region71: #{dual_efficient_vit_v2_forward.1} parent=59 // pred_region
        %p633 = scmp.lt.s32.totalorder %s28, 1
        %s634 = scalar_select %p633, %s28, 1
        %s635 = smul.addr %s634, 4
        %s636 = smul.addr %s635, 8
        %s637 = scalar_lea.vmem %s9, %s636
      $region72: #{dual_efficient_vit_v2_forward.1} parent=59 // pred_fallthru
        _
      // Predicated region
      $region73: #{dual_efficient_vit_v2_forward.1} parent=59 // pred_check
        %p638 = pneg %p273
      $region74: #{dual_efficient_vit_v2_forward.1} parent=59 // pred_check_branch
        %640 = sbr.rel (%p638) target = $region76
      $region75: #{dual_efficient_vit_v2_forward.1} parent=59 // pred_region
        %p641 = scmp.lt.s32.totalorder %s28, 1
        %s642 = scalar_select %p641, %s28, 1
        %s643 = smul.addr %s642, 2
        %s644 = smul.addr %s643, 8
        %s645 = scalar_lea.vmem %s10, %s644
      $region76: #{dual_efficient_vit_v2_forward.1} parent=59 // pred_fallthru
        _
      // Predicated region
      $region77: #{dual_efficient_vit_v2_forward.1} parent=59 // pred_check
        %p646 = pneg %p299
      $region78: #{dual_efficient_vit_v2_forward.1} parent=59 // pred_check_branch
        %648 = sbr.rel (%p646) target = $region80
      $region79: #{dual_efficient_vit_v2_forward.1} parent=59 // pred_region
        %p649 = scmp.lt.s32.totalorder %s28, 1
        %s650 = scalar_select %p649, %s28, 1
        %s651 = scalar_lea.vmem %s11, %s650
      $region80: #{dual_efficient_vit_v2_forward.1} parent=59 // pred_fallthru
        _
      // Predicated region
      $region81: #{dual_efficient_vit_v2_forward.1} parent=59 // pred_check
        %p652 = pneg %p325
      $region82: #{dual_efficient_vit_v2_forward.1} parent=59 // pred_check_branch
        %654 = sbr.rel (%p652) target = $region84
      $region83: #{dual_efficient_vit_v2_forward.1} parent=59 // pred_region
        %p655 = scmp.lt.s32.totalorder %s28, 1
        %s656 = scalar_select %p655, %s28, 1
        %s657 = scalar_lea.vmem %s12, %s656
      $region84: #{dual_efficient_vit_v2_forward.1} parent=59 // pred_fallthru
        _
      // Predicated region
      $region85: #{dual_efficient_vit_v2_forward.1} parent=59 // pred_check
        %p658 = pneg %p351
      $region86: #{dual_efficient_vit_v2_forward.1} parent=59 // pred_check_branch
        %660 = sbr.rel (%p658) target = $region88
      $region87: #{dual_efficient_vit_v2_forward.1} parent=59 // pred_region
        %p661 = scmp.lt.s32.totalorder %s28, 1
        %s662 = scalar_select %p661, %s28, 1
        %s663 = scalar_lea.vmem %s13, %s662
      $region88: #{dual_efficient_vit_v2_forward.1} parent=59 // pred_fallthru
        _
      // Predicated region
      $region89: #{dual_efficient_vit_v2_forward.1} parent=59 // pred_check
        %p664 = pneg %p377
      $region90: #{dual_efficient_vit_v2_forward.1} parent=59 // pred_check_branch
        %666 = sbr.rel (%p664) target = $region92
      $region91: #{dual_efficient_vit_v2_forward.1} parent=59 // pred_region
        %p667 = scmp.lt.s32.totalorder %s28, 1
        %s668 = scalar_select %p667, %s28, 1
        %s669 = smul.addr %s668, 4
        %s670 = smul.addr %s669, 8
        %s671 = scalar_lea.vmem %s14, %s670
      $region92: #{dual_efficient_vit_v2_forward.1} parent=59 // pred_fallthru
        _
      // Predicated region
      $region93: #{dual_efficient_vit_v2_forward.1} parent=59 // pred_check
        %p672 = pneg %p403
      $region94: #{dual_efficient_vit_v2_forward.1} parent=59 // pred_check_branch
        %674 = sbr.rel (%p672) target = $region96
      $region95: #{dual_efficient_vit_v2_forward.1} parent=59 // pred_region
        %p675 = scmp.lt.s32.totalorder %s28, 1
        %s676 = scalar_select %p675, %s28, 1
        %s677 = scalar_lea.vmem %s15, %s676
      $region96: #{dual_efficient_vit_v2_forward.1} parent=59 // pred_fallthru
        _
      // Predicated region
      $region97: #{dual_efficient_vit_v2_forward.1} parent=59 // pred_check
        %p678 = pneg %p429
      $region98: #{dual_efficient_vit_v2_forward.1} parent=59 // pred_check_branch
        %680 = sbr.rel (%p678) target = $region100
      $region99: #{dual_efficient_vit_v2_forward.1} parent=59 // pred_region
        %p681 = scmp.lt.s32.totalorder %s28, 1
        %s682 = scalar_select %p681, %s28, 1
        %s683 = smul.addr %s682, 8
        %s684 = smul.addr %s683, 8
        %s685 = scalar_lea.vmem %s16, %s684
      $region100: #{dual_efficient_vit_v2_forward.1} parent=59 // pred_fallthru
        _
      // Predicated region
      $region101: #{dual_efficient_vit_v2_forward.1} parent=59 // pred_check
        %p686 = pneg %p455
      $region102: #{dual_efficient_vit_v2_forward.1} parent=59 // pred_check_branch
        %688 = sbr.rel (%p686) target = $region104
      $region103: #{dual_efficient_vit_v2_forward.1} parent=59 // pred_region
        %p689 = scmp.lt.s32.totalorder %s28, 1
        %s690 = scalar_select %p689, %s28, 1
        %s691 = scalar_lea.vmem %s17, %s690
      $region104: #{dual_efficient_vit_v2_forward.1} parent=59 // pred_fallthru
        _
    $region60: #{dual_efficient_vit_v2_forward.1} parent=5 // pred_fallthru
      _
    %p692 = scmp.le.s32.totalorder 1, %s28
    %p693 = scmp.lt.s32.totalorder %s28, 3
    %p694 = pnand %p692, %p693
    %p695 = pneg %p694
    // Predicated region
    $region105: #{dual_efficient_vit_v2_forward.1} parent=5 // pred_check
      _
    $region106: #{dual_efficient_vit_v2_forward.1} parent=5 // pred_check_branch
      %697 = sbr.rel (%p694) target = $region108
    $region107: #{dual_efficient_vit_v2_forward.1} parent=5 // pred_region
      %s698 = ssub.s32 %s28, 1
      %p699 = pneg %p49
      %p700 = pneg %p46
      %p701 = pneg %p70
      %p702 = pneg %p67
      %p703 = pneg %p91
      %p704 = pneg %p88
      %p705 = pneg %p112
      %p706 = pneg %p109
      %p707 = pneg %p133
      %p708 = pneg %p130
      %p709 = pneg %p154
      %p710 = pneg %p151
      %p711 = pneg %p175
      %p712 = pneg %p172
      %p713 = scmp.lt.s32.totalorder %s33, 1
      %s714 = scalar_select %p713, %s33, 1
      %s715 = scalar_lea.vmem %s7, %s714
      %p716 = pneg %p201
      %p717 = pneg %p198
      %p718 = scmp.lt.s32.totalorder %s33, 1
      %s719 = scalar_select %p718, %s33, 1
      %s720 = scalar_lea.vmem %s8, %s719
      %p721 = pneg %p227
      %p722 = pneg %p224
      %p723 = scmp.lt.s32.totalorder %s33, 1
      %s724 = scalar_select %p723, %s33, 1
      %s725 = smul.addr %s724, 4
      %s726 = smul.addr %s725, 8
      %s727 = scalar_lea.vmem %s9, %s726
      %p728 = pneg %p253
      %p729 = pneg %p250
      %p730 = scmp.lt.s32.totalorder %s33, 1
      %s731 = scalar_select %p730, %s33, 1
      %s732 = smul.addr %s731, 2
      %s733 = smul.addr %s732, 8
      %s734 = scalar_lea.vmem %s10, %s733
      %p735 = pneg %p279
      %p736 = pneg %p276
      %p737 = scmp.lt.s32.totalorder %s33, 1
      %s738 = scalar_select %p737, %s33, 1
      %s739 = scalar_lea.vmem %s11, %s738
      %p740 = pneg %p305
      %p741 = pneg %p302
      %p742 = scmp.lt.s32.totalorder %s33, 1
      %s743 = scalar_select %p742, %s33, 1
      %s744 = scalar_lea.vmem %s12, %s743
      %p745 = pneg %p331
      %p746 = pneg %p328
      %p747 = scmp.lt.s32.totalorder %s33, 1
      %s748 = scalar_select %p747, %s33, 1
      %s749 = scalar_lea.vmem %s13, %s748
      %p750 = pneg %p357
      %p751 = pneg %p354
      %p752 = scmp.lt.s32.totalorder %s33, 1
      %s753 = scalar_select %p752, %s33, 1
      %s754 = smul.addr %s753, 4
      %s755 = smul.addr %s754, 8
      %s756 = scalar_lea.vmem %s14, %s755
      %p757 = pneg %p383
      %p758 = pneg %p380
      %p759 = scmp.lt.s32.totalorder %s33, 1
      %s760 = scalar_select %p759, %s33, 1
      %s761 = scalar_lea.vmem %s15, %s760
      %p762 = pneg %p409
      %p763 = pneg %p406
      %p764 = scmp.lt.s32.totalorder %s33, 1
      %s765 = scalar_select %p764, %s33, 1
      %s766 = smul.addr %s765, 8
      %s767 = smul.addr %s766, 8
      %s768 = scalar_lea.vmem %s16, %s767
      %p769 = pneg %p435
      %p770 = pneg %p432
      %p771 = scmp.lt.s32.totalorder %s33, 1
      %s772 = scalar_select %p771, %s33, 1
      %s773 = scalar_lea.vmem %s17, %s772
      %p774 = pneg %p461
      %p775 = pneg %p458
      %p776 = pneg %p482
      %p777 = pneg %p479
      %p778 = pneg %p503
      %p779 = pneg %p500
      %p780 = pneg %p524
      %p781 = pneg %p521
      %p782 = pneg %p545
      %p783 = pneg %p542
      %p784 = pneg %p566
      %p785 = pneg %p563
      %p786 = scmp.lt.s32.totalorder %s33, 1
      %s787 = scalar_select %p786, %s33, 1
      %s788 = scalar_lea.vmem %s7, %s787
      %p789 = scmp.lt.s32.totalorder %s33, 1
      %s790 = scalar_select %p789, %s33, 1
      %s791 = scalar_lea.vmem %s8, %s790
      %p792 = scmp.lt.s32.totalorder %s33, 1
      %s793 = scalar_select %p792, %s33, 1
      %s794 = smul.addr %s793, 4
      %s795 = smul.addr %s794, 8
      %s796 = scalar_lea.vmem %s9, %s795
      %p797 = scmp.lt.s32.totalorder %s33, 1
      %s798 = scalar_select %p797, %s33, 1
      %s799 = smul.addr %s798, 2
      %s800 = smul.addr %s799, 8
      %s801 = scalar_lea.vmem %s10, %s800
      %p802 = scmp.lt.s32.totalorder %s33, 1
      %s803 = scalar_select %p802, %s33, 1
      %s804 = scalar_lea.vmem %s11, %s803
      %p805 = scmp.lt.s32.totalorder %s33, 1
      %s806 = scalar_select %p805, %s33, 1
      %s807 = scalar_lea.vmem %s12, %s806
      %p808 = scmp.lt.s32.totalorder %s33, 1
      %s809 = scalar_select %p808, %s33, 1
      %s810 = scalar_lea.vmem %s13, %s809
      %p811 = scmp.lt.s32.totalorder %s33, 1
      %s812 = scalar_select %p811, %s33, 1
      %s813 = smul.addr %s812, 4
      %s814 = smul.addr %s813, 8
      %s815 = scalar_lea.vmem %s14, %s814
      %p816 = scmp.lt.s32.totalorder %s33, 1
      %s817 = scalar_select %p816, %s33, 1
      %s818 = scalar_lea.vmem %s15, %s817
      %p819 = scmp.lt.s32.totalorder %s33, 1
      %s820 = scalar_select %p819, %s33, 1
      %s821 = smul.addr %s820, 8
      %s822 = smul.addr %s821, 8
      %s823 = scalar_lea.vmem %s16, %s822
      %p824 = scmp.lt.s32.totalorder %s33, 1
      %s825 = scalar_select %p824, %s33, 1
      %s826 = scalar_lea.vmem %s17, %s825
      %v827 = vlaneseq
      %v828 = vand.u32 %v827, 127
      %p829 = scmp.eq.s32.totalorder %s33, 0
      // Predicated region
      $region109: #{dual_efficient_vit_v2_forward.1} parent=107 // pred_check
        %p830 = pneg %p829
      $region110: #{dual_efficient_vit_v2_forward.1} parent=107 // pred_check_branch
        %832 = sbr.rel (%p830) target = $region112
      $region111: #{dual_efficient_vit_v2_forward.1} parent=107 // pred_region
        %v833 = vld [vmem:[%s0] sm:$0xff]
        %v834 = vld [vmem:[%s0 + $0x8] sm:$0xff]
        %v835 = vld [vmem:[%s0 + $0x10] sm:$0xff]
        %v836 = vld [vmem:[%s0 + $0x18] sm:$0xff]
        %v837 = vld [vmem:[%s1] sm:$0xff]
        %v838 = vld [vmem:[%s1 + $0x8] sm:$0xff]
        %v839 = vld [vmem:[%s1 + $0x10] sm:$0xff]
        %v840 = vld [vmem:[%s1 + $0x18] sm:$0xff]
        %841 = vmatpush.xpose.msra.mxu0 0.0
        %842 = vmatpush.xpose.msra.mxu0 0.0
        %843 = vmatpush.xpose.msra.mxu0 0.0
        %844 = vmatpush.xpose.msra.mxu0 0.0
        %845 = vmatpush.xpose.msra.mxu0 0.0
        %846 = vmatpush.xpose.msra.mxu0 0.0
        %847 = vmatpush.xpose.msra.mxu0 0.0
        %848 = vmatpush.xpose.msra.mxu0 0.0
        %849 = vmatpush.xpose.msra.mxu0 0.0
        %850 = vmatpush.xpose.msra.mxu0 0.0
        %851 = vmatpush.xpose.msra.mxu0 0.0
        %852 = vmatpush.xpose.msra.mxu0 0.0
        %853 = vmatpush.xpose.msra.mxu0 0.0
        %854 = vmatpush.xpose.msra.mxu0 0.0
        %855 = vmatpush.xpose.msra.mxu0 0.0
        %856 = vmatpush.xpose.msra.mxu0 %v837
        %857 = vmatmul.f32.gmra.mxu0 %v833
        %v858 = vpop.f32.mrf.mxu0
        %v859 = vadd.f32 0.0, %v858
        %860 = vdwg.mxu0
        %861 = vmatpush.xpose.msra.mxu0 0.0
        %862 = vmatpush.xpose.msra.mxu0 0.0
        %863 = vmatpush.xpose.msra.mxu0 0.0
        %864 = vmatpush.xpose.msra.mxu0 0.0
        %865 = vmatpush.xpose.msra.mxu0 0.0
        %866 = vmatpush.xpose.msra.mxu0 0.0
        %867 = vmatpush.xpose.msra.mxu0 0.0
        %868 = vmatpush.xpose.msra.mxu0 0.0
        %869 = vmatpush.xpose.msra.mxu0 0.0
        %870 = vmatpush.xpose.msra.mxu0 0.0
        %871 = vmatpush.xpose.msra.mxu0 0.0
        %872 = vmatpush.xpose.msra.mxu0 0.0
        %873 = vmatpush.xpose.msra.mxu0 0.0
        %874 = vmatpush.xpose.msra.mxu0 0.0
        %875 = vmatpush.xpose.msra.mxu0 0.0
        %876 = vmatpush.xpose.msra.mxu0 %v838
        %877 = vmatmul.f32.gmra.mxu0 %v834
        %v878 = vpop.f32.mrf.mxu0
        %v879 = vadd.f32 %v859, %v878
        %880 = vdwg.mxu0
        %881 = vmatpush.xpose.msra.mxu0 0.0
        %882 = vmatpush.xpose.msra.mxu0 0.0
        %883 = vmatpush.xpose.msra.mxu0 0.0
        %884 = vmatpush.xpose.msra.mxu0 0.0
        %885 = vmatpush.xpose.msra.mxu0 0.0
        %886 = vmatpush.xpose.msra.mxu0 0.0
        %887 = vmatpush.xpose.msra.mxu0 0.0
        %888 = vmatpush.xpose.msra.mxu0 0.0
        %889 = vmatpush.xpose.msra.mxu0 0.0
        %890 = vmatpush.xpose.msra.mxu0 0.0
        %891 = vmatpush.xpose.msra.mxu0 0.0
        %892 = vmatpush.xpose.msra.mxu0 0.0
        %893 = vmatpush.xpose.msra.mxu0 0.0
        %894 = vmatpush.xpose.msra.mxu0 0.0
        %895 = vmatpush.xpose.msra.mxu0 0.0
        %896 = vmatpush.xpose.msra.mxu0 %v839
        %897 = vmatmul.f32.gmra.mxu0 %v835
        %v898 = vpop.f32.mrf.mxu0
        %v899 = vadd.f32 0.0, %v898
        %900 = vdwg.mxu0
        %901 = vmatpush.xpose.msra.mxu0 0.0
        %902 = vmatpush.xpose.msra.mxu0 0.0
        %903 = vmatpush.xpose.msra.mxu0 0.0
        %904 = vmatpush.xpose.msra.mxu0 0.0
        %905 = vmatpush.xpose.msra.mxu0 0.0
        %906 = vmatpush.xpose.msra.mxu0 0.0
        %907 = vmatpush.xpose.msra.mxu0 0.0
        %908 = vmatpush.xpose.msra.mxu0 0.0
        %909 = vmatpush.xpose.msra.mxu0 0.0
        %910 = vmatpush.xpose.msra.mxu0 0.0
        %911 = vmatpush.xpose.msra.mxu0 0.0
        %912 = vmatpush.xpose.msra.mxu0 0.0
        %913 = vmatpush.xpose.msra.mxu0 0.0
        %914 = vmatpush.xpose.msra.mxu0 0.0
        %915 = vmatpush.xpose.msra.mxu0 0.0
        %916 = vmatpush.xpose.msra.mxu0 %v840
        %917 = vmatmul.f32.gmra.mxu0 %v836
        %v918 = vpop.f32.mrf.mxu0
        %v919 = vadd.f32 %v899, %v918
        %920 = vdwg.mxu0
        %v921 = vmul.f32 %v879, 0.0625
        %v922 = vmul.f32 %v919, 0.0625
        %vm923 = vcmp.ge.s32.totalorder %v828, 1
        %vm924 = vcmp.le.s32.totalorder %v828, 4
        %vm925 = vmand %vm923, %vm924
        %v926 = vsel %vm925, 1, 0
        %vm927 = vcmp.eq.s32.totalorder %v926, 1
        %v928 = vsel %vm927, %v921, -1e+30
        %v929 = vsel %vm927, %v922, -1e+30
        %vm930 = vcmask 64512
        %v931 = vsel %vm930, %v928, -inf
        %932 = vmax.xlane.f32.xlu0 %v931
        %v933 = vpop.xlane.xlu0 %932
        %v934 = vsel %vm930, %v929, -inf
        %935 = vmax.xlane.f32.xlu0 %v934
        %v936 = vpop.xlane.xlu0 %935
        %v937 = vsub.f32 %v928, %v933
        %v938 = vsub.f32 %v929, %v936
        %v939 = vmul.f32 %v937, 1.442695
        %v940 = vpow.pop %v939
        %v941 = vmul.f32 %v938, 1.442695
        %v942 = vpow.pop %v941
        %v943 = vsel %vm930, %v940, 0.0
        %944 = vadd.xlane.f32.xlu0 %v943
        %v945 = vpop.xlane.xlu0 %944
        %v946 = vsel %vm930, %v942, 0.0
        %947 = vadd.xlane.f32.xlu0 %v946
        %v948 = vpop.xlane.xlu0 %947
        %v949 = vrcp.pop %v945
        %v950 = vrcp.pop %v948
        %v951 = vmul.f32 %v940, %v949
        %v952 = vmul.f32 %v942, %v950
        %v954 = vsel %vm930, %v951, 0
        %956 = vmatpush.msra.mxu0 0.0
        %957 = vmatpush.msra.mxu0 0.0
        %958 = vmatpush.msra.mxu0 0.0
        %959 = vmatpush.msra.mxu0 0.0
        %960 = vmatpush.msra.mxu0 0.0
        %961 = vmatpush.msra.mxu0 0.0
        %962 = vmatpush.msra.mxu0 0.0
        %963 = vmatpush.msra.mxu0 0.0
        %964 = vmatpush.msra.mxu0 0.0
        %965 = vmatpush.msra.mxu0 0.0
        %966 = vmatpush.msra.mxu0 0.0
        %967 = vmatpush.msra.mxu0 0.0
        %968 = vmatpush.msra.mxu0 0.0
        %969 = vmatpush.msra.mxu0 0.0
        %970 = vmatpush.msra.mxu0 0.0
        %971 = vmatpush.msra.mxu0 %v837
        %972 = vmatmul.f32.gmra.mxu0 %v954
        %v973 = vpop.f32.mrf.mxu0
        %v974 = vadd.f32 0.0, %v973
        %975 = vdwg.mxu0
        %976 = vmatpush.msra.mxu0 0.0
        %977 = vmatpush.msra.mxu0 0.0
        %978 = vmatpush.msra.mxu0 0.0
        %979 = vmatpush.msra.mxu0 0.0
        %980 = vmatpush.msra.mxu0 0.0
        %981 = vmatpush.msra.mxu0 0.0
        %982 = vmatpush.msra.mxu0 0.0
        %983 = vmatpush.msra.mxu0 0.0
        %984 = vmatpush.msra.mxu0 0.0
        %985 = vmatpush.msra.mxu0 0.0
        %986 = vmatpush.msra.mxu0 0.0
        %987 = vmatpush.msra.mxu0 0.0
        %988 = vmatpush.msra.mxu0 0.0
        %989 = vmatpush.msra.mxu0 0.0
        %990 = vmatpush.msra.mxu0 0.0
        %991 = vmatpush.msra.mxu0 %v838
        %992 = vmatmul.f32.gmra.mxu0 %v954
        %v993 = vpop.f32.mrf.mxu0
        %v994 = vadd.f32 0.0, %v993
        %995 = vdwg.mxu0
        %v997 = vsel %vm930, %v952, 0
        %999 = vmatpush.msra.mxu0 0.0
        %1000 = vmatpush.msra.mxu0 0.0
        %1001 = vmatpush.msra.mxu0 0.0
        %1002 = vmatpush.msra.mxu0 0.0
        %1003 = vmatpush.msra.mxu0 0.0
        %1004 = vmatpush.msra.mxu0 0.0
        %1005 = vmatpush.msra.mxu0 0.0
        %1006 = vmatpush.msra.mxu0 0.0
        %1007 = vmatpush.msra.mxu0 0.0
        %1008 = vmatpush.msra.mxu0 0.0
        %1009 = vmatpush.msra.mxu0 0.0
        %1010 = vmatpush.msra.mxu0 0.0
        %1011 = vmatpush.msra.mxu0 0.0
        %1012 = vmatpush.msra.mxu0 0.0
        %1013 = vmatpush.msra.mxu0 0.0
        %1014 = vmatpush.msra.mxu0 %v839
        %1015 = vmatmul.f32.gmra.mxu0 %v997
        %v1016 = vpop.f32.mrf.mxu0
        %v1017 = vadd.f32 0.0, %v1016
        %1018 = vdwg.mxu0
        %1019 = vmatpush.msra.mxu0 0.0
        %1020 = vmatpush.msra.mxu0 0.0
        %1021 = vmatpush.msra.mxu0 0.0
        %1022 = vmatpush.msra.mxu0 0.0
        %1023 = vmatpush.msra.mxu0 0.0
        %1024 = vmatpush.msra.mxu0 0.0
        %1025 = vmatpush.msra.mxu0 0.0
        %1026 = vmatpush.msra.mxu0 0.0
        %1027 = vmatpush.msra.mxu0 0.0
        %1028 = vmatpush.msra.mxu0 0.0
        %1029 = vmatpush.msra.mxu0 0.0
        %1030 = vmatpush.msra.mxu0 0.0
        %1031 = vmatpush.msra.mxu0 0.0
        %1032 = vmatpush.msra.mxu0 0.0
        %1033 = vmatpush.msra.mxu0 0.0
        %1034 = vmatpush.msra.mxu0 %v840
        %1035 = vmatmul.f32.gmra.mxu0 %v997
        %v1036 = vpop.f32.mrf.mxu0
        %v1037 = vadd.f32 0.0, %v1036
        %1038 = vdwg.mxu0
        %v1039 = vld [vmem:[%s2] sm:$0xff]
        %v1040 = vld [vmem:[%s2 + $0x8] sm:$0xff]
        %v1041 = vld [vmem:[%s2 + $0x10] sm:$0xff]
        %v1042 = vld [vmem:[%s2 + $0x18] sm:$0xff]
        %v1043 = vld [vmem:[%s2 + $0x20] sm:$0xff]
        %v1044 = vld [vmem:[%s2 + $0x28] sm:$0xff]
        %v1045 = vld [vmem:[%s2 + $0x30] sm:$0xff]
        %v1046 = vld [vmem:[%s2 + $0x38] sm:$0xff]
        %v1047 = vld [vmem:[%s2 + $0x40] sm:$0xff]
        %v1048 = vld [vmem:[%s2 + $0x48] sm:$0xff]
        %v1049 = vld [vmem:[%s2 + $0x50] sm:$0xff]
        %v1050 = vld [vmem:[%s2 + $0x58] sm:$0xff]
        %v1051 = vld [vmem:[%s2 + $0x60] sm:$0xff]
        %v1052 = vld [vmem:[%s2 + $0x68] sm:$0xff]
        %v1053 = vld [vmem:[%s2 + $0x70] sm:$0xff]
        %v1054 = vld [vmem:[%s2 + $0x78] sm:$0xff]
        %v1055 = vld [vmem:[%s2 + $0x80] sm:$0xff]
        %v1056 = vld [vmem:[%s2 + $0x88] sm:$0xff]
        %v1057 = vld [vmem:[%s2 + $0x90] sm:$0xff]
        %v1058 = vld [vmem:[%s2 + $0x98] sm:$0xff]
        %v1059 = vld [vmem:[%s2 + $0xa0] sm:$0xff]
        %v1060 = vld [vmem:[%s2 + $0xa8] sm:$0xff]
        %v1061 = vld [vmem:[%s2 + $0xb0] sm:$0xff]
        %v1062 = vld [vmem:[%s2 + $0xb8] sm:$0xff]
        %v1063 = vld [vmem:[%s2 + $0xc0] sm:$0xff]
        %v1064 = vld [vmem:[%s2 + $0xc8] sm:$0xff]
        %v1065 = vld [vmem:[%s2 + $0xd0] sm:$0xff]
        %v1066 = vld [vmem:[%s2 + $0xd8] sm:$0xff]
        %v1067 = vld [vmem:[%s2 + $0xe0] sm:$0xff]
        %v1068 = vld [vmem:[%s2 + $0xe8] sm:$0xff]
        %v1069 = vld [vmem:[%s2 + $0xf0] sm:$0xff]
        %v1070 = vld [vmem:[%s2 + $0xf8] sm:$0xff]
        %v1071 = vld [vmem:[%s3] sm:$0xff]
        %v1072 = vld [vmem:[%s3 + $0x8] sm:$0xff]
        %v1073 = vld [vmem:[%s3 + $0x10] sm:$0xff]
        %v1074 = vld [vmem:[%s3 + $0x18] sm:$0xff]
        %v1075 = vld [vmem:[%s3 + $0x20] sm:$0xff]
        %v1076 = vld [vmem:[%s3 + $0x28] sm:$0xff]
        %v1077 = vld [vmem:[%s3 + $0x30] sm:$0xff]
        %v1078 = vld [vmem:[%s3 + $0x38] sm:$0xff]
        %v1079 = vld [vmem:[%s3 + $0x40] sm:$0xff]
        %v1080 = vld [vmem:[%s3 + $0x48] sm:$0xff]
        %v1081 = vld [vmem:[%s3 + $0x50] sm:$0xff]
        %v1082 = vld [vmem:[%s3 + $0x58] sm:$0xff]
        %v1083 = vld [vmem:[%s3 + $0x60] sm:$0xff]
        %v1084 = vld [vmem:[%s3 + $0x68] sm:$0xff]
        %v1085 = vld [vmem:[%s3 + $0x70] sm:$0xff]
        %v1086 = vld [vmem:[%s3 + $0x78] sm:$0xff]
        %v1087 = vld [vmem:[%s3 + $0x80] sm:$0xff]
        %v1088 = vld [vmem:[%s3 + $0x88] sm:$0xff]
        %v1089 = vld [vmem:[%s3 + $0x90] sm:$0xff]
        %v1090 = vld [vmem:[%s3 + $0x98] sm:$0xff]
        %v1091 = vld [vmem:[%s3 + $0xa0] sm:$0xff]
        %v1092 = vld [vmem:[%s3 + $0xa8] sm:$0xff]
        %v1093 = vld [vmem:[%s3 + $0xb0] sm:$0xff]
        %v1094 = vld [vmem:[%s3 + $0xb8] sm:$0xff]
        %v1095 = vld [vmem:[%s3 + $0xc0] sm:$0xff]
        %v1096 = vld [vmem:[%s3 + $0xc8] sm:$0xff]
        %v1097 = vld [vmem:[%s3 + $0xd0] sm:$0xff]
        %v1098 = vld [vmem:[%s3 + $0xd8] sm:$0xff]
        %v1099 = vld [vmem:[%s3 + $0xe0] sm:$0xff]
        %v1100 = vld [vmem:[%s3 + $0xe8] sm:$0xff]
        %v1101 = vld [vmem:[%s3 + $0xf0] sm:$0xff]
        %v1102 = vld [vmem:[%s3 + $0xf8] sm:$0xff]
        %1103 = vmatpush.msra.mxu0 %v1086
        %1104 = vmatpush.msra.mxu0 %v1085
        %1105 = vmatpush.msra.mxu0 %v1084
        %1106 = vmatpush.msra.mxu0 %v1083
        %1107 = vmatpush.msra.mxu0 %v1082
        %1108 = vmatpush.msra.mxu0 %v1081
        %1109 = vmatpush.msra.mxu0 %v1080
        %1110 = vmatpush.msra.mxu0 %v1079
        %1111 = vmatpush.msra.mxu0 %v1078
        %1112 = vmatpush.msra.mxu0 %v1077
        %1113 = vmatpush.msra.mxu0 %v1076
        %1114 = vmatpush.msra.mxu0 %v1075
        %1115 = vmatpush.msra.mxu0 %v1074
        %1116 = vmatpush.msra.mxu0 %v1073
        %1117 = vmatpush.msra.mxu0 %v1072
        %1118 = vmatpush.msra.mxu0 %v1071
        %1119 = vmatmul.f32.gmra.mxu0 %v974
        %v1120 = vpop.f32.mrf.mxu0
        %v1121 = vadd.f32 0.0, %v1120
        %1122 = vmatmul.f32.gmra.mxu0 %v1017
        %v1123 = vpop.f32.mrf.mxu0
        %v1124 = vadd.f32 0.0, %v1123
        %1125 = vdwg.mxu0
        %1126 = vmatpush.msra.mxu0 %v1102
        %1127 = vmatpush.msra.mxu0 %v1101
        %1128 = vmatpush.msra.mxu0 %v1100
        %1129 = vmatpush.msra.mxu0 %v1099
        %1130 = vmatpush.msra.mxu0 %v1098
        %1131 = vmatpush.msra.mxu0 %v1097
        %1132 = vmatpush.msra.mxu0 %v1096
        %1133 = vmatpush.msra.mxu0 %v1095
        %1134 = vmatpush.msra.mxu0 %v1094
        %1135 = vmatpush.msra.mxu0 %v1093
        %1136 = vmatpush.msra.mxu0 %v1092
        %1137 = vmatpush.msra.mxu0 %v1091
        %1138 = vmatpush.msra.mxu0 %v1090
        %1139 = vmatpush.msra.mxu0 %v1089
        %1140 = vmatpush.msra.mxu0 %v1088
        %1141 = vmatpush.msra.mxu0 %v1087
        %1142 = vmatmul.f32.gmra.mxu0 %v994
        %v1143 = vpop.f32.mrf.mxu0
        %v1144 = vadd.f32 %v1121, %v1143
        %1145 = vmatmul.f32.gmra.mxu0 %v1037
        %v1146 = vpop.f32.mrf.mxu0
        %v1147 = vadd.f32 %v1124, %v1146
        %1148 = vdwg.mxu0
        %1149 = vmatpush.msra.mxu0 %v1054
        %1150 = vmatpush.msra.mxu0 %v1053
        %1151 = vmatpush.msra.mxu0 %v1052
        %1152 = vmatpush.msra.mxu0 %v1051
        %1153 = vmatpush.msra.mxu0 %v1050
        %1154 = vmatpush.msra.mxu0 %v1049
        %1155 = vmatpush.msra.mxu0 %v1048
        %1156 = vmatpush.msra.mxu0 %v1047
        %1157 = vmatpush.msra.mxu0 %v1046
        %1158 = vmatpush.msra.mxu0 %v1045
        %1159 = vmatpush.msra.mxu0 %v1044
        %1160 = vmatpush.msra.mxu0 %v1043
        %1161 = vmatpush.msra.mxu0 %v1042
        %1162 = vmatpush.msra.mxu0 %v1041
        %1163 = vmatpush.msra.mxu0 %v1040
        %1164 = vmatpush.msra.mxu0 %v1039
        %1165 = vmatmul.f32.gmra.mxu0 %v833
        %v1166 = vpop.f32.mrf.mxu0
        %v1167 = vadd.f32 %v1144, %v1166
        %1168 = vmatmul.f32.gmra.mxu0 %v835
        %v1169 = vpop.f32.mrf.mxu0
        %v1170 = vadd.f32 %v1147, %v1169
        %1171 = vdwg.mxu0
        %1172 = vmatpush.msra.mxu0 %v1070
        %1173 = vmatpush.msra.mxu0 %v1069
        %1174 = vmatpush.msra.mxu0 %v1068
        %1175 = vmatpush.msra.mxu0 %v1067
        %1176 = vmatpush.msra.mxu0 %v1066
        %1177 = vmatpush.msra.mxu0 %v1065
        %1178 = vmatpush.msra.mxu0 %v1064
        %1179 = vmatpush.msra.mxu0 %v1063
        %1180 = vmatpush.msra.mxu0 %v1062
        %1181 = vmatpush.msra.mxu0 %v1061
        %1182 = vmatpush.msra.mxu0 %v1060
        %1183 = vmatpush.msra.mxu0 %v1059
        %1184 = vmatpush.msra.mxu0 %v1058
        %1185 = vmatpush.msra.mxu0 %v1057
        %1186 = vmatpush.msra.mxu0 %v1056
        %1187 = vmatpush.msra.mxu0 %v1055
        %1188 = vmatmul.f32.gmra.mxu0 %v834
        %v1189 = vpop.f32.mrf.mxu0
        %v1190 = vadd.f32 %v1167, %v1189
        %1191 = vmatmul.f32.gmra.mxu0 %v836
        %v1192 = vpop.f32.mrf.mxu0
        %v1193 = vadd.f32 %v1170, %v1192
        %1194 = vdwg.mxu0
        %v1195 = vld [vmem:[%s4] sm:$0x1]
        %v1197 = vperm.slane %v1195, 0
        %v1199 = vadd.f32 %v1190, %v1197
        %v1200 = vadd.f32 %v1193, %v1197
        %v1201 = vlaneseq
        %v1202 = vshrl.u32 %v1201, 7
        %v1203 = vld [vmem:[%s5] sm:$0x1]
        %v1204 = vld [vmem:[%s6] sm:$0x1]
        %v1205 = vadd.f32 %v1203, %v1204
        %vm1206 = vcmp.eq.s32.totalorder %v1202, 0
        %v1207 = vld [vmem:[%s6] sm:$0xff]
        %v1208 = vadd.f32 %v1199, %v1207
        %v1209 = vadd.f32 %v1200, %v1207
        %v1210 = vsel %vm1206, 1, 0
        %vm1211 = vcmp.eq.s32.totalorder %v1210, 1
        %v1213 = vperm.slane %v1205, 0
        %v1215 = vsel %vm1211, %v1213, %v1208
        %v1216 = vsel %vm1211, %v1213, %v1209
        %vm1217 = vcmask 261120
        %1218 = vst.msk [vmem:[#allocation2] sm:$0xff] %vm1217, %v1215
        %1219 = vst.msk [vmem:[#allocation2 + $0x8] sm:$0xff] %vm1217, %v1216
      $region112: #{dual_efficient_vit_v2_forward.1} parent=107 // pred_fallthru
        _
      %v1220 = vld [vmem:[#allocation2] sm:$0xff]
      %v1221 = vld [vmem:[#allocation2 + $0x8] sm:$0xff]
      %v1222 = vld [vmem:[%s788] sm:$0x1]
      %v1223 = vld [vmem:[%s791] sm:$0x1]
      %vm1224 = vcmask 261120
      %v1225 = vsel %vm1224, %v1220, 0.0
      %1226 = vadd.xlane.f32.xlu0 %v1225
      %v1227 = vpop.xlane.xlu0 %1226
      %v1228 = vsel %vm1224, %v1221, 0.0
      %1229 = vadd.xlane.f32.xlu0 %v1228
      %v1230 = vpop.xlane.xlu0 %1229
      %v1231 = vrcp.pop 32.0
      %v1232 = vmul.f32 32.0, %v1231
      %v1233 = vsub.f32 1.0, %v1232
      %v1234 = vmul.f32 %v1231, %v1233
      %v1235 = vadd.f32 %v1231, %v1234
      %vm1236 = vweird.f32 %v1231
      %v1237 = vsel %vm1236, %v1231, %v1235
      %v1238 = vmul.f32 %v1227, %v1237
      %v1239 = vmul.f32 %v1230, %v1237
      %v1240 = vsub.f32 %v1220, %v1238
      %v1241 = vsub.f32 %v1221, %v1239
      %v1242 = vmul.f32 %v1240, %v1240
      %v1243 = vmul.f32 %v1241, %v1241
      %v1244 = vsel %vm1224, %v1242, 0.0
      %1245 = vadd.xlane.f32.xlu0 %v1244
      %v1246 = vpop.xlane.xlu0 %1245
      %v1247 = vsel %vm1224, %v1243, 0.0
      %1248 = vadd.xlane.f32.xlu0 %v1247
      %v1249 = vpop.xlane.xlu0 %1248
      %v1250 = vmul.f32 %v1246, %v1237
      %v1251 = vmul.f32 %v1249, %v1237
      %v1252 = vadd.f32 %v1250, 1e-05
      %v1253 = vadd.f32 %v1251, 1e-05
      %v1254 = vrsqrt.pop %v1252
      %v1255 = vmul.f32 %v1254, %v1252
      %v1256 = vmul.f32 %v1255, %v1254
      %v1257 = vmul.f32 0.5, %v1256
      %v1258 = vsub.f32 1.5, %v1257
      %v1259 = vmul.f32 %v1254, %v1258
      %vm1260 = vweird.f32 %v1252
      %vm1261 = vweird.f32 %v1254
      %vm1262 = vmor %vm1260, %vm1261
      %v1263 = vsel %vm1262, %v1254, %v1259
      %v1264 = vrsqrt.pop %v1253
      %v1265 = vmul.f32 %v1264, %v1253
      %v1266 = vmul.f32 %v1265, %v1264
      %v1267 = vmul.f32 0.5, %v1266
      %v1268 = vsub.f32 1.5, %v1267
      %v1269 = vmul.f32 %v1264, %v1268
      %vm1270 = vweird.f32 %v1253
      %vm1271 = vweird.f32 %v1264
      %vm1272 = vmor %vm1270, %vm1271
      %v1273 = vsel %vm1272, %v1264, %v1269
      %v1274 = vmul.f32 %v1240, %v1263
      %v1275 = vmul.f32 %v1241, %v1273
      %v1277 = vperm.slane %v1222, 0
      %v1279 = vmul.f32 %v1274, %v1277
      %v1280 = vmul.f32 %v1275, %v1277
      %v1282 = vperm.slane %v1223, 0
      %v1284 = vadd.f32 %v1279, %v1282
      %v1285 = vadd.f32 %v1280, %v1282
      %v1286 = vld [vmem:[%s796] sm:$0xff]
      %v1287 = vld [vmem:[%s796 + $0x8] sm:$0xff]
      %v1288 = vld [vmem:[%s796 + $0x10] sm:$0xff]
      %v1289 = vld [vmem:[%s796 + $0x18] sm:$0xff]
      %v1291 = vsel %vm1224, %v1284, 0
      %v1294 = vsel %vm1224, %v1285, 0
      %1296 = vmatpush.msra.mxu0 0.0
      %1297 = vmatpush.msra.mxu0 0.0
      %1298 = vmatpush.msra.mxu0 0.0
      %1299 = vmatpush.msra.mxu0 0.0
      %1300 = vmatpush.msra.mxu0 0.0
      %1301 = vmatpush.msra.mxu0 0.0
      %1302 = vmatpush.msra.mxu0 0.0
      %1303 = vmatpush.msra.mxu0 0.0
      %1304 = vmatpush.msra.mxu0 0.0
      %1305 = vmatpush.msra.mxu0 0.0
      %1306 = vmatpush.msra.mxu0 0.0
      %1307 = vmatpush.msra.mxu0 0.0
      %1308 = vmatpush.msra.mxu0 %v1289
      %1309 = vmatpush.msra.mxu0 %v1288
      %1310 = vmatpush.msra.mxu0 %v1287
      %1311 = vmatpush.msra.mxu0 %v1286
      %1312 = vmatmul.f32.gmra.mxu0 %v1291
      %v1313 = vpop.f32.mrf.mxu0
      %v1314 = vadd.f32 0.0, %v1313
      %1315 = vmatmul.f32.gmra.mxu0 %v1294
      %v1316 = vpop.f32.mrf.mxu0
      %v1317 = vadd.f32 0.0, %v1316
      %1318 = vdwg.mxu0
      %vm1319 = vcmp.lt.s32.totalorder %v828, 5
      %v1320 = vld [vmem:[%s801] sm:$0xff]
      %v1321 = vld [vmem:[%s801 + $0x8] sm:$0xff]
      %v1322 = vmul.f32 %v1314, 0.35355338
      %v1323 = vmul.f32 %v1317, 0.35355338
      %1325 = vrot.lane.b32.xlu0 %v1314, 112
      %v1326 = vpop.permute.xlu0 %1325
      %vm1327 = vcmask 64512
      %v1329 = vsel %vm1327, %v1322, 0
      %v1331 = vsel %vm1327, %v1326, 0
      %1333 = vmatpush.xpose.msra.mxu0 0.0
      %1334 = vmatpush.xpose.msra.mxu0 0.0
      %1335 = vmatpush.xpose.msra.mxu0 0.0
      %1336 = vmatpush.xpose.msra.mxu0 0.0
      %1337 = vmatpush.xpose.msra.mxu0 0.0
      %1338 = vmatpush.xpose.msra.mxu0 0.0
      %1339 = vmatpush.xpose.msra.mxu0 0.0
      %1340 = vmatpush.xpose.msra.mxu0 0.0
      %1341 = vmatpush.xpose.msra.mxu0 0.0
      %1342 = vmatpush.xpose.msra.mxu0 0.0
      %1343 = vmatpush.xpose.msra.mxu0 0.0
      %1344 = vmatpush.xpose.msra.mxu0 0.0
      %1345 = vmatpush.xpose.msra.mxu0 0.0
      %1346 = vmatpush.xpose.msra.mxu0 0.0
      %1347 = vmatpush.xpose.msra.mxu0 0.0
      %1348 = vmatpush.xpose.msra.mxu0 %v1331
      %1349 = vmatmul.f32.gmra.mxu0 %v1329
      %v1350 = vpop.f32.mrf.mxu0
      %v1351 = vadd.f32 0.0, %v1350
      %1352 = vdwg.mxu0
      %1354 = vrot.lane.b32.xlu0 %v1317, 112
      %v1355 = vpop.permute.xlu0 %1354
      %v1357 = vsel %vm1327, %v1323, 0
      %v1359 = vsel %vm1327, %v1355, 0
      %1361 = vmatpush.xpose.msra.mxu0 0.0
      %1362 = vmatpush.xpose.msra.mxu0 0.0
      %1363 = vmatpush.xpose.msra.mxu0 0.0
      %1364 = vmatpush.xpose.msra.mxu0 0.0
      %1365 = vmatpush.xpose.msra.mxu0 0.0
      %1366 = vmatpush.xpose.msra.mxu0 0.0
      %1367 = vmatpush.xpose.msra.mxu0 0.0
      %1368 = vmatpush.xpose.msra.mxu0 0.0
      %1369 = vmatpush.xpose.msra.mxu0 0.0
      %1370 = vmatpush.xpose.msra.mxu0 0.0
      %1371 = vmatpush.xpose.msra.mxu0 0.0
      %1372 = vmatpush.xpose.msra.mxu0 0.0
      %1373 = vmatpush.xpose.msra.mxu0 0.0
      %1374 = vmatpush.xpose.msra.mxu0 0.0
      %1375 = vmatpush.xpose.msra.mxu0 0.0
      %1376 = vmatpush.xpose.msra.mxu0 %v1359
      %1377 = vmatmul.f32.gmra.mxu0 %v1357
      %v1378 = vpop.f32.mrf.mxu0
      %v1379 = vadd.f32 0.0, %v1378
      %1380 = vdwg.mxu0
      %v1381 = vsel %vm1319, 1, 0
      %vm1382 = vcmp.eq.s32.totalorder %v1381, 1
      %v1383 = vsel %vm1382, %v1351, -1e+30
      %v1384 = vsel %vm1382, %v1379, -1e+30
      %v1385 = vsel %vm1327, %v1383, -inf
      %1386 = vmax.xlane.f32.xlu0 %v1385
      %v1387 = vpop.xlane.xlu0 %1386
      %v1388 = vsel %vm1327, %v1384, -inf
      %1389 = vmax.xlane.f32.xlu0 %v1388
      %v1390 = vpop.xlane.xlu0 %1389
      %v1391 = vsub.f32 %v1383, %v1387
      %v1392 = vsub.f32 %v1384, %v1390
      %v1393 = vmul.f32 %v1391, 1.442695
      %v1394 = vpow.pop %v1393
      %v1395 = vmul.f32 %v1392, 1.442695
      %v1396 = vpow.pop %v1395
      %v1397 = vsel %vm1327, %v1394, 0.0
      %1398 = vadd.xlane.f32.xlu0 %v1397
      %v1399 = vpop.xlane.xlu0 %1398
      %v1400 = vsel %vm1327, %v1396, 0.0
      %1401 = vadd.xlane.f32.xlu0 %v1400
      %v1402 = vpop.xlane.xlu0 %1401
      %v1403 = vrcp.pop %v1399
      %v1404 = vrcp.pop %v1402
      %v1405 = vmul.f32 %v1394, %v1403
      %v1406 = vmul.f32 %v1396, %v1404
      %1407 = vrot.lane.b32.xlu0 %v1314, 96
      %v1408 = vpop.permute.xlu0 %1407
      %v1411 = vsel %vm1327, %v1405, 0
      %1413 = vmatpush.msra.mxu0 0.0
      %1414 = vmatpush.msra.mxu0 0.0
      %1415 = vmatpush.msra.mxu0 0.0
      %1416 = vmatpush.msra.mxu0 0.0
      %1417 = vmatpush.msra.mxu0 0.0
      %1418 = vmatpush.msra.mxu0 0.0
      %1419 = vmatpush.msra.mxu0 0.0
      %1420 = vmatpush.msra.mxu0 0.0
      %1421 = vmatpush.msra.mxu0 0.0
      %1422 = vmatpush.msra.mxu0 0.0
      %1423 = vmatpush.msra.mxu0 0.0
      %1424 = vmatpush.msra.mxu0 0.0
      %1425 = vmatpush.msra.mxu0 0.0
      %1426 = vmatpush.msra.mxu0 0.0
      %1427 = vmatpush.msra.mxu0 0.0
      %1428 = vmatpush.msra.mxu0 %v1408
      %1429 = vmatmul.f32.gmra.mxu0 %v1411
      %v1430 = vpop.f32.mrf.mxu0
      %v1431 = vadd.f32 0.0, %v1430
      %1432 = vdwg.mxu0
      %1433 = vrot.lane.b32.xlu0 %v1317, 96
      %v1434 = vpop.permute.xlu0 %1433
      %v1437 = vsel %vm1327, %v1406, 0
      %1439 = vmatpush.msra.mxu0 0.0
      %1440 = vmatpush.msra.mxu0 0.0
      %1441 = vmatpush.msra.mxu0 0.0
      %1442 = vmatpush.msra.mxu0 0.0
      %1443 = vmatpush.msra.mxu0 0.0
      %1444 = vmatpush.msra.mxu0 0.0
      %1445 = vmatpush.msra.mxu0 0.0
      %1446 = vmatpush.msra.mxu0 0.0
      %1447 = vmatpush.msra.mxu0 0.0
      %1448 = vmatpush.msra.mxu0 0.0
      %1449 = vmatpush.msra.mxu0 0.0
      %1450 = vmatpush.msra.mxu0 0.0
      %1451 = vmatpush.msra.mxu0 0.0
      %1452 = vmatpush.msra.mxu0 0.0
      %1453 = vmatpush.msra.mxu0 0.0
      %1454 = vmatpush.msra.mxu0 %v1434
      %1455 = vmatmul.f32.gmra.mxu0 %v1437
      %v1456 = vpop.f32.mrf.mxu0
      %v1457 = vadd.f32 0.0, %v1456
      %1458 = vdwg.mxu0
      %1459 = vrot.lane.b32.xlu0 %v1322, 120
      %v1460 = vpop.permute.xlu0 %1459
      %1461 = vrot.lane.b32.xlu0 %v1314, 104
      %v1462 = vpop.permute.xlu0 %1461
      %v1463 = vsel %vm1327, %v1460, 0
      %v1465 = vsel %vm1327, %v1462, 0
      %1467 = vmatpush.xpose.msra.mxu0 0.0
      %1468 = vmatpush.xpose.msra.mxu0 0.0
      %1469 = vmatpush.xpose.msra.mxu0 0.0
      %1470 = vmatpush.xpose.msra.mxu0 0.0
      %1471 = vmatpush.xpose.msra.mxu0 0.0
      %1472 = vmatpush.xpose.msra.mxu0 0.0
      %1473 = vmatpush.xpose.msra.mxu0 0.0
      %1474 = vmatpush.xpose.msra.mxu0 0.0
      %1475 = vmatpush.xpose.msra.mxu0 0.0
      %1476 = vmatpush.xpose.msra.mxu0 0.0
      %1477 = vmatpush.xpose.msra.mxu0 0.0
      %1478 = vmatpush.xpose.msra.mxu0 0.0
      %1479 = vmatpush.xpose.msra.mxu0 0.0
      %1480 = vmatpush.xpose.msra.mxu0 0.0
      %1481 = vmatpush.xpose.msra.mxu0 0.0
      %1482 = vmatpush.xpose.msra.mxu0 %v1465
      %1483 = vmatmul.f32.gmra.mxu0 %v1463
      %v1484 = vpop.f32.mrf.mxu0
      %v1485 = vadd.f32 0.0, %v1484
      %1486 = vdwg.mxu0
      %1487 = vrot.lane.b32.xlu0 %v1323, 120
      %v1488 = vpop.permute.xlu0 %1487
      %1489 = vrot.lane.b32.xlu0 %v1317, 104
      %v1490 = vpop.permute.xlu0 %1489
      %v1491 = vsel %vm1327, %v1488, 0
      %v1493 = vsel %vm1327, %v1490, 0
      %1495 = vmatpush.xpose.msra.mxu0 0.0
      %1496 = vmatpush.xpose.msra.mxu0 0.0
      %1497 = vmatpush.xpose.msra.mxu0 0.0
      %1498 = vmatpush.xpose.msra.mxu0 0.0
      %1499 = vmatpush.xpose.msra.mxu0 0.0
      %1500 = vmatpush.xpose.msra.mxu0 0.0
      %1501 = vmatpush.xpose.msra.mxu0 0.0
      %1502 = vmatpush.xpose.msra.mxu0 0.0
      %1503 = vmatpush.xpose.msra.mxu0 0.0
      %1504 = vmatpush.xpose.msra.mxu0 0.0
      %1505 = vmatpush.xpose.msra.mxu0 0.0
      %1506 = vmatpush.xpose.msra.mxu0 0.0
      %1507 = vmatpush.xpose.msra.mxu0 0.0
      %1508 = vmatpush.xpose.msra.mxu0 0.0
      %1509 = vmatpush.xpose.msra.mxu0 0.0
      %1510 = vmatpush.xpose.msra.mxu0 %v1493
      %1511 = vmatmul.f32.gmra.mxu0 %v1491
      %v1512 = vpop.f32.mrf.mxu0
      %v1513 = vadd.f32 0.0, %v1512
      %1514 = vdwg.mxu0
      %v1515 = vsel %vm1382, %v1485, -1e+30
      %v1516 = vsel %vm1382, %v1513, -1e+30
      %v1517 = vsel %vm1327, %v1515, -inf
      %1518 = vmax.xlane.f32.xlu0 %v1517
      %v1519 = vpop.xlane.xlu0 %1518
      %v1520 = vsel %vm1327, %v1516, -inf
      %1521 = vmax.xlane.f32.xlu0 %v1520
      %v1522 = vpop.xlane.xlu0 %1521
      %v1523 = vsub.f32 %v1515, %v1519
      %v1524 = vsub.f32 %v1516, %v1522
      %v1525 = vmul.f32 %v1523, 1.442695
      %v1526 = vpow.pop %v1525
      %v1527 = vmul.f32 %v1524, 1.442695
      %v1528 = vpow.pop %v1527
      %v1529 = vsel %vm1327, %v1526, 0.0
      %1530 = vadd.xlane.f32.xlu0 %v1529
      %v1531 = vpop.xlane.xlu0 %1530
      %v1532 = vsel %vm1327, %v1528, 0.0
      %1533 = vadd.xlane.f32.xlu0 %v1532
      %v1534 = vpop.xlane.xlu0 %1533
      %v1535 = vrcp.pop %v1531
      %v1536 = vrcp.pop %v1534
      %v1537 = vmul.f32 %v1526, %v1535
      %v1538 = vmul.f32 %v1528, %v1536
      %1539 = vrot.lane.b32.xlu0 %v1314, 88
      %v1540 = vpop.permute.xlu0 %1539
      %v1543 = vsel %vm1327, %v1537, 0
      %1545 = vmatpush.msra.mxu0 0.0
      %1546 = vmatpush.msra.mxu0 0.0
      %1547 = vmatpush.msra.mxu0 0.0
      %1548 = vmatpush.msra.mxu0 0.0
      %1549 = vmatpush.msra.mxu0 0.0
      %1550 = vmatpush.msra.mxu0 0.0
      %1551 = vmatpush.msra.mxu0 0.0
      %1552 = vmatpush.msra.mxu0 0.0
      %1553 = vmatpush.msra.mxu0 0.0
      %1554 = vmatpush.msra.mxu0 0.0
      %1555 = vmatpush.msra.mxu0 0.0
      %1556 = vmatpush.msra.mxu0 0.0
      %1557 = vmatpush.msra.mxu0 0.0
      %1558 = vmatpush.msra.mxu0 0.0
      %1559 = vmatpush.msra.mxu0 0.0
      %1560 = vmatpush.msra.mxu0 %v1540
      %1561 = vmatmul.f32.gmra.mxu0 %v1543
      %v1562 = vpop.f32.mrf.mxu0
      %v1563 = vadd.f32 0.0, %v1562
      %1564 = vdwg.mxu0
      %1565 = vrot.lane.b32.xlu0 %v1317, 88
      %v1566 = vpop.permute.xlu0 %1565
      %v1569 = vsel %vm1327, %v1538, 0
      %1571 = vmatpush.msra.mxu0 0.0
      %1572 = vmatpush.msra.mxu0 0.0
      %1573 = vmatpush.msra.mxu0 0.0
      %1574 = vmatpush.msra.mxu0 0.0
      %1575 = vmatpush.msra.mxu0 0.0
      %1576 = vmatpush.msra.mxu0 0.0
      %1577 = vmatpush.msra.mxu0 0.0
      %1578 = vmatpush.msra.mxu0 0.0
      %1579 = vmatpush.msra.mxu0 0.0
      %1580 = vmatpush.msra.mxu0 0.0
      %1581 = vmatpush.msra.mxu0 0.0
      %1582 = vmatpush.msra.mxu0 0.0
      %1583 = vmatpush.msra.mxu0 0.0
      %1584 = vmatpush.msra.mxu0 0.0
      %1585 = vmatpush.msra.mxu0 0.0
      %1586 = vmatpush.msra.mxu0 %v1566
      %1587 = vmatmul.f32.gmra.mxu0 %v1569
      %v1588 = vpop.f32.mrf.mxu0
      %v1589 = vadd.f32 0.0, %v1588
      %1590 = vdwg.mxu0
      %v1592 = vsel %vm1327, %v1563, 0
      %v1595 = vsel %vm1327, %v1589, 0
      %1597 = vmatpush.msra.mxu0 0.0
      %1598 = vmatpush.msra.mxu0 0.0
      %1599 = vmatpush.msra.mxu0 0.0
      %1600 = vmatpush.msra.mxu0 0.0
      %1601 = vmatpush.msra.mxu0 0.0
      %1602 = vmatpush.msra.mxu0 0.0
      %1603 = vmatpush.msra.mxu0 0.0
      %1604 = vmatpush.msra.mxu0 0.0
      %1605 = vmatpush.msra.mxu0 0.0
      %1606 = vmatpush.msra.mxu0 0.0
      %1607 = vmatpush.msra.mxu0 0.0
      %1608 = vmatpush.msra.mxu0 0.0
      %1609 = vmatpush.msra.mxu0 0.0
      %1610 = vmatpush.msra.mxu0 0.0
      %1611 = vmatpush.msra.mxu0 0.0
      %1612 = vmatpush.msra.mxu0 %v1321
      %1613 = vmatmul.f32.gmra.mxu0 %v1592
      %v1614 = vpop.f32.mrf.mxu0
      %v1615 = vadd.f32 0.0, %v1614
      %1616 = vmatmul.f32.gmra.mxu0 %v1595
      %v1617 = vpop.f32.mrf.mxu0
      %v1618 = vadd.f32 0.0, %v1617
      %1619 = vdwg.mxu0
      %v1621 = vsel %vm1327, %v1431, 0
      %v1624 = vsel %vm1327, %v1457, 0
      %1626 = vmatpush.msra.mxu0 0.0
      %1627 = vmatpush.msra.mxu0 0.0
      %1628 = vmatpush.msra.mxu0 0.0
      %1629 = vmatpush.msra.mxu0 0.0
      %1630 = vmatpush.msra.mxu0 0.0
      %1631 = vmatpush.msra.mxu0 0.0
      %1632 = vmatpush.msra.mxu0 0.0
      %1633 = vmatpush.msra.mxu0 0.0
      %1634 = vmatpush.msra.mxu0 0.0
      %1635 = vmatpush.msra.mxu0 0.0
      %1636 = vmatpush.msra.mxu0 0.0
      %1637 = vmatpush.msra.mxu0 0.0
      %1638 = vmatpush.msra.mxu0 0.0
      %1639 = vmatpush.msra.mxu0 0.0
      %1640 = vmatpush.msra.mxu0 0.0
      %1641 = vmatpush.msra.mxu0 %v1320
      %1642 = vmatmul.f32.gmra.mxu0 %v1621
      %v1643 = vpop.f32.mrf.mxu0
      %v1644 = vadd.f32 %v1615, %v1643
      %1645 = vmatmul.f32.gmra.mxu0 %v1624
      %v1646 = vpop.f32.mrf.mxu0
      %v1647 = vadd.f32 %v1618, %v1646
      %1648 = vdwg.mxu0
      %v1649 = vadd.f32 %v1220, %v1644
      %v1650 = vadd.f32 %v1221, %v1647
      %v1651 = vld [vmem:[%s804] sm:$0x1]
      %v1653 = vperm.slane %v1651, 0
      %v1655 = vadd.f32 %v1649, %v1653
      %v1656 = vadd.f32 %v1650, %v1653
      %v1657 = vld [vmem:[%s807] sm:$0x1]
      %v1658 = vld [vmem:[%s810] sm:$0x1]
      %v1659 = vsel %vm1224, %v1655, 0.0
      %1660 = vadd.xlane.f32.xlu0 %v1659
      %v1661 = vpop.xlane.xlu0 %1660
      %v1662 = vsel %vm1224, %v1656, 0.0
      %1663 = vadd.xlane.f32.xlu0 %v1662
      %v1664 = vpop.xlane.xlu0 %1663
      %v1665 = vmul.f32 %v1661, %v1237
      %v1666 = vmul.f32 %v1664, %v1237
      %v1667 = vsub.f32 %v1655, %v1665
      %v1668 = vsub.f32 %v1656, %v1666
      %v1669 = vmul.f32 %v1667, %v1667
      %v1670 = vmul.f32 %v1668, %v1668
      %v1671 = vsel %vm1224, %v1669, 0.0
      %1672 = vadd.xlane.f32.xlu0 %v1671
      %v1673 = vpop.xlane.xlu0 %1672
      %v1674 = vsel %vm1224, %v1670, 0.0
      %1675 = vadd.xlane.f32.xlu0 %v1674
      %v1676 = vpop.xlane.xlu0 %1675
      %v1677 = vmul.f32 %v1673, %v1237
      %v1678 = vmul.f32 %v1676, %v1237
      %v1679 = vadd.f32 %v1677, 1e-05
      %v1680 = vadd.f32 %v1678, 1e-05
      %v1681 = vrsqrt.pop %v1679
      %v1682 = vmul.f32 %v1681, %v1679
      %v1683 = vmul.f32 %v1682, %v1681
      %v1684 = vmul.f32 0.5, %v1683
      %v1685 = vsub.f32 1.5, %v1684
      %v1686 = vmul.f32 %v1681, %v1685
      %vm1687 = vweird.f32 %v1679
      %vm1688 = vweird.f32 %v1681
      %vm1689 = vmor %vm1687, %vm1688
      %v1690 = vsel %vm1689, %v1681, %v1686
      %v1691 = vrsqrt.pop %v1680
      %v1692 = vmul.f32 %v1691, %v1680
      %v1693 = vmul.f32 %v1692, %v1691
      %v1694 = vmul.f32 0.5, %v1693
      %v1695 = vsub.f32 1.5, %v1694
      %v1696 = vmul.f32 %v1691, %v1695
      %vm1697 = vweird.f32 %v1680
      %vm1698 = vweird.f32 %v1691
      %vm1699 = vmor %vm1697, %vm1698
      %v1700 = vsel %vm1699, %v1691, %v1696
      %v1701 = vmul.f32 %v1667, %v1690
      %v1702 = vmul.f32 %v1668, %v1700
      %v1704 = vperm.slane %v1657, 0
      %v1706 = vmul.f32 %v1701, %v1704
      %v1707 = vmul.f32 %v1702, %v1704
      %v1709 = vperm.slane %v1658, 0
      %v1711 = vadd.f32 %v1706, %v1709
      %v1712 = vadd.f32 %v1707, %v1709
      %v1713 = vld [vmem:[%s815] sm:$0xff]
      %v1714 = vld [vmem:[%s815 + $0x8] sm:$0xff]
      %v1715 = vld [vmem:[%s815 + $0x10] sm:$0xff]
      %v1716 = vld [vmem:[%s815 + $0x18] sm:$0xff]
      %v1717 = vld [vmem:[%s818] sm:$0x1]
      %v1719 = vperm.slane %v1717, 0
      %v1722 = vsel %vm1224, %v1711, 0
      %v1725 = vsel %vm1224, %v1712, 0
      %1727 = vmatpush.msra.mxu0 0.0
      %1728 = vmatpush.msra.mxu0 0.0
      %1729 = vmatpush.msra.mxu0 0.0
      %1730 = vmatpush.msra.mxu0 0.0
      %1731 = vmatpush.msra.mxu0 0.0
      %1732 = vmatpush.msra.mxu0 0.0
      %1733 = vmatpush.msra.mxu0 0.0
      %1734 = vmatpush.msra.mxu0 0.0
      %1735 = vmatpush.msra.mxu0 0.0
      %1736 = vmatpush.msra.mxu0 0.0
      %1737 = vmatpush.msra.mxu0 0.0
      %1738 = vmatpush.msra.mxu0 0.0
      %1739 = vmatpush.msra.mxu0 %v1716
      %1740 = vmatpush.msra.mxu0 %v1715
      %1741 = vmatpush.msra.mxu0 %v1714
      %1742 = vmatpush.msra.mxu0 %v1713
      %1743 = vmatmul.f32.gmra.mxu0 %v1722
      %v1744 = vpop.f32.mrf.mxu0
      %v1745 = vadd.f32 %v1719, %v1744
      %1746 = vmatmul.f32.gmra.mxu0 %v1725
      %v1747 = vpop.f32.mrf.mxu0
      %v1748 = vadd.f32 %v1719, %v1747
      %1749 = vdwg.mxu0
      %v1750 = vmul.f32 %v1745, 0.5
      %v1751 = vmul.f32 %v1748, 0.5
      %v1752 = vmul.f32 %v1745, 0.044715
      %v1753 = vmul.f32 %v1748, 0.044715
      %v1754 = vmul.f32 %v1752, %v1745
      %v1755 = vmul.f32 %v1753, %v1748
      %v1756 = vmul.f32 %v1754, %v1745
      %v1757 = vmul.f32 %v1755, %v1748
      %v1758 = vadd.f32 %v1745, %v1756
      %v1759 = vadd.f32 %v1748, %v1757
      %v1760 = vmul.f32 %v1758, 0.7978846
      %v1761 = vmul.f32 %v1759, 0.7978846
      %v1762 = vtanh.pop %v1760
      %v1763 = vtanh.pop %v1761
      %v1764 = vadd.f32 %v1762, 1.0
      %v1765 = vadd.f32 %v1763, 1.0
      %v1766 = vmul.f32 %v1750, %v1764
      %v1767 = vmul.f32 %v1751, %v1765
      %v1768 = vld [vmem:[%s823] sm:$0xff]
      %v1769 = vld [vmem:[%s823 + $0x8] sm:$0xff]
      %v1770 = vld [vmem:[%s823 + $0x10] sm:$0xff]
      %v1771 = vld [vmem:[%s823 + $0x18] sm:$0xff]
      %v1772 = vld [vmem:[%s823 + $0x20] sm:$0xff]
      %v1773 = vld [vmem:[%s823 + $0x28] sm:$0xff]
      %v1774 = vld [vmem:[%s823 + $0x30] sm:$0xff]
      %v1775 = vld [vmem:[%s823 + $0x38] sm:$0xff]
      %vm1776 = vcmask 523264
      %v1778 = vsel %vm1776, %v1766, 0
      %v1781 = vsel %vm1776, %v1767, 0
      %1783 = vmatpush.msra.mxu0 0.0
      %1784 = vmatpush.msra.mxu0 0.0
      %1785 = vmatpush.msra.mxu0 0.0
      %1786 = vmatpush.msra.mxu0 0.0
      %1787 = vmatpush.msra.mxu0 0.0
      %1788 = vmatpush.msra.mxu0 0.0
      %1789 = vmatpush.msra.mxu0 0.0
      %1790 = vmatpush.msra.mxu0 0.0
      %1791 = vmatpush.msra.mxu0 %v1775
      %1792 = vmatpush.msra.mxu0 %v1774
      %1793 = vmatpush.msra.mxu0 %v1773
      %1794 = vmatpush.msra.mxu0 %v1772
      %1795 = vmatpush.msra.mxu0 %v1771
      %1796 = vmatpush.msra.mxu0 %v1770
      %1797 = vmatpush.msra.mxu0 %v1769
      %1798 = vmatpush.msra.mxu0 %v1768
      %1799 = vmatmul.f32.gmra.mxu0 %v1778
      %v1800 = vpop.f32.mrf.mxu0
      %v1801 = vadd.f32 0.0, %v1800
      %1802 = vmatmul.f32.gmra.mxu0 %v1781
      %v1803 = vpop.f32.mrf.mxu0
      %v1804 = vadd.f32 0.0, %v1803
      %1805 = vdwg.mxu0
      %v1806 = vadd.f32 %v1655, %v1801
      %v1807 = vadd.f32 %v1656, %v1804
      %v1808 = vld [vmem:[%s826] sm:$0x1]
      %v1810 = vperm.slane %v1808, 0
      %v1812 = vadd.f32 %v1806, %v1810
      %v1813 = vadd.f32 %v1807, %v1810
      %1814 = vst.msk [vmem:[#allocation2] sm:$0xff] %vm1224, %v1812
      %1815 = vst.msk [vmem:[#allocation2 + $0x8] sm:$0xff] %vm1224, %v1813
      %p1816 = scmp.eq.s32.totalorder %s33, 1
      // Predicated region
      $region113: #{dual_efficient_vit_v2_forward.1} parent=107 // pred_check
        %p1817 = pneg %p1816
      $region114: #{dual_efficient_vit_v2_forward.1} parent=107 // pred_check_branch
        %1819 = sbr.rel (%p1817) target = $region116
      $region115: #{dual_efficient_vit_v2_forward.1} parent=107 // pred_region
        %v1820 = vlaneseq
        %v1821 = vshrl.u32 %v1820, 7
        %v1822 = vmul.u32 %v1821, 8
        %vm1823 = vcmp.eq.s32.totalorder %v828, %v1822
        %v1824 = vsel %vm1823, 1, 0
        %v1825 = vcvt.s32.f32 %v1824
        %vm1826 = vcmask 130048
        %v1828 = vsel %vm1826, %v1825, 0
        %1830 = vmatpush.msra.mxu0 0.0
        %1831 = vmatpush.msra.mxu0 0.0
        %1832 = vmatpush.msra.mxu0 0.0
        %1833 = vmatpush.msra.mxu0 0.0
        %1834 = vmatpush.msra.mxu0 0.0
        %1835 = vmatpush.msra.mxu0 0.0
        %1836 = vmatpush.msra.mxu0 0.0
        %1837 = vmatpush.msra.mxu0 0.0
        %1838 = vmatpush.msra.mxu0 0.0
        %1839 = vmatpush.msra.mxu0 0.0
        %1840 = vmatpush.msra.mxu0 0.0
        %1841 = vmatpush.msra.mxu0 0.0
        %1842 = vmatpush.msra.mxu0 0.0
        %1843 = vmatpush.msra.mxu0 0.0
        %1844 = vmatpush.msra.mxu0 %v1813
        %1845 = vmatpush.msra.mxu0 %v1812
        %1846 = vmatmul.f32.gmra.mxu0 %v1828
        %v1847 = vpop.f32.mrf.mxu0
        %v1848 = vadd.f32 0.0, %v1847
        %1849 = vdwg.mxu0
        %v1850 = vld [vmem:[%s18] sm:$0xff]
        %v1851 = vld [vmem:[%s18 + $0x8] sm:$0xff]
        %v1852 = vld [vmem:[%s18 + $0x10] sm:$0xff]
        %v1853 = vld [vmem:[%s18 + $0x18] sm:$0xff]
        %v1854 = vld [vmem:[%s19] sm:$0x1]
        %v1856 = vperm.slane %v1854, 0
        %v1859 = vsel %vm1224, %v1848, 0
        %1861 = vmatpush.msra.mxu0 0.0
        %1862 = vmatpush.msra.mxu0 0.0
        %1863 = vmatpush.msra.mxu0 0.0
        %1864 = vmatpush.msra.mxu0 0.0
        %1865 = vmatpush.msra.mxu0 0.0
        %1866 = vmatpush.msra.mxu0 0.0
        %1867 = vmatpush.msra.mxu0 0.0
        %1868 = vmatpush.msra.mxu0 0.0
        %1869 = vmatpush.msra.mxu0 0.0
        %1870 = vmatpush.msra.mxu0 0.0
        %1871 = vmatpush.msra.mxu0 0.0
        %1872 = vmatpush.msra.mxu0 0.0
        %1873 = vmatpush.msra.mxu0 %v1853
        %1874 = vmatpush.msra.mxu0 %v1852
        %1875 = vmatpush.msra.mxu0 %v1851
        %1876 = vmatpush.msra.mxu0 %v1850
        %1877 = vmatmul.f32.gmra.mxu0 %v1859
        %v1878 = vpop.f32.mrf.mxu0
        %v1879 = vadd.f32 %v1856, %v1878
        %1880 = vdwg.mxu0
        %v1881 = vmax.f32 %v1879, 0.0
        %v1882 = vld [vmem:[%s20] sm:$0xff]
        %v1883 = vld [vmem:[%s20 + $0x8] sm:$0xff]
        %v1884 = vld [vmem:[%s20 + $0x10] sm:$0xff]
        %v1885 = vld [vmem:[%s20 + $0x18] sm:$0xff]
        %v1886 = vld [vmem:[%s20 + $0x20] sm:$0xff]
        %v1887 = vld [vmem:[%s20 + $0x28] sm:$0xff]
        %v1888 = vld [vmem:[%s20 + $0x30] sm:$0xff]
        %v1889 = vld [vmem:[%s20 + $0x38] sm:$0xff]
        %v1890 = vld [vmem:[%s21] sm:$0x1]
        %v1892 = vperm.slane %v1890, 0
        %v1895 = vsel %vm1776, %v1881, 0
        %1897 = vmatpush.msra.mxu0 0.0
        %1898 = vmatpush.msra.mxu0 0.0
        %1899 = vmatpush.msra.mxu0 0.0
        %1900 = vmatpush.msra.mxu0 0.0
        %1901 = vmatpush.msra.mxu0 0.0
        %1902 = vmatpush.msra.mxu0 0.0
        %1903 = vmatpush.msra.mxu0 0.0
        %1904 = vmatpush.msra.mxu0 0.0
        %1905 = vmatpush.msra.mxu0 %v1889
        %1906 = vmatpush.msra.mxu0 %v1888
        %1907 = vmatpush.msra.mxu0 %v1887
        %1908 = vmatpush.msra.mxu0 %v1886
        %1909 = vmatpush.msra.mxu0 %v1885
        %1910 = vmatpush.msra.mxu0 %v1884
        %1911 = vmatpush.msra.mxu0 %v1883
        %1912 = vmatpush.msra.mxu0 %v1882
        %1913 = vmatmul.f32.gmra.mxu0 %v1895
        %v1914 = vpop.f32.mrf.mxu0
        %v1915 = vadd.f32 %v1892, %v1914
        %1916 = vdwg.mxu0
        %v1917 = vsub.f32 0.0, %v1915
        %v1918 = vmul.f32 %v1917, 1.442695
        %v1919 = vpow.pop %v1918
        %v1920 = vadd.f32 %v1919, 1.0
        %v1921 = vrcp.pop %v1920
        %v1922 = vmul.f32 %v1920, %v1921
        %v1923 = vsub.f32 1.0, %v1922
        %v1924 = vmul.f32 %v1921, %v1923
        %v1925 = vadd.f32 %v1921, %v1924
        %vm1926 = vweird.f32 %v1920
        %vm1927 = vweird.f32 %v1921
        %vm1928 = vmor %vm1926, %vm1927
        %v1929 = vsel %vm1928, %v1921, %v1925
        %v1930 = vand.u32 2147483647, %v1920
        %vm1931 = vcmp.eq.f32.partialorder %v1930, 8.507059e+37
        %v1932 = vand.u32 %v1920, 2147483648
        %v1933 = vor.u32 1.1754944e-38, %v1932
        %v1934 = vsel %vm1931, %v1933, %v1929
        %v1935 = vmul.f32 1.0, %v1934
        %1936 = vst [vmem:[%s22] sm:$0x3] %v1935
      $region116: #{dual_efficient_vit_v2_forward.1} parent=107 // pred_fallthru
        _
      // Predicated region
      $region117: #{dual_efficient_vit_v2_forward.1} parent=107 // pred_check
        %p1937 = pneg %p563
      $region118: #{dual_efficient_vit_v2_forward.1} parent=107 // pred_check_branch
        %1939 = sbr.rel (%p1937) target = $region120
      $region119: #{dual_efficient_vit_v2_forward.1} parent=107 // pred_region
        _
      $region120: #{dual_efficient_vit_v2_forward.1} parent=107 // pred_fallthru
        _
      // Predicated region
      $region121: #{dual_efficient_vit_v2_forward.1} parent=107 // pred_check
        %p1940 = pneg %p563
      $region122: #{dual_efficient_vit_v2_forward.1} parent=107 // pred_check_branch
        %1942 = sbr.rel (%p1940) target = $region124
      $region123: #{dual_efficient_vit_v2_forward.1} parent=107 // pred_region
        _
      $region124: #{dual_efficient_vit_v2_forward.1} parent=107 // pred_fallthru
        _
    $region108: #{dual_efficient_vit_v2_forward.1} parent=5 // pred_fallthru
      _
    %p1943 = scmp.le.s32.totalorder 2, %s28
    // Predicated region
    $region125: #{dual_efficient_vit_v2_forward.1} parent=5 // pred_check
      %p1944 = pneg %p1943
    $region126: #{dual_efficient_vit_v2_forward.1} parent=5 // pred_check_branch
      %1946 = sbr.rel (%p1944) target = $region128
    $region127: #{dual_efficient_vit_v2_forward.1} parent=5 // pred_region
      %s1947 = ssub.s32 %s28, 2
    $region128: #{dual_efficient_vit_v2_forward.1} parent=5 // pred_fallthru
      _
  $region6: #{dual_efficient_vit_v2_forward.1} parent=0 // loop_footer
    %s32 = sadd.s32 1, %s28
  $region7: #{dual_efficient_vit_v2_forward.1} parent=0 // loop_footer_branch
    %27 = sbr.rel target = $region3
  $region8: #{dual_efficient_vit_v2_forward.1} parent=0 // loop_exit
    _

</llo_original>
